<compile_context>
chip_gen: v7x
topology: tpu7x:2x2x1
jax: 0.10.0
libtpu: 0.0.40
codegen_flags: <defaults>
</compile_context>

<pallas_src>
import jax
import jax.numpy as jnp
from jax.experimental import pallas as pl
from jax.experimental.pallas import tpu as pltpu

HP = 128  # hidden dim 100 zero-padded to a lane multiple (exactly preserves the function)


# ----------------------------- Pallas kernel --------------------------------
def sno_kernel(x_ref, w1_ref, wv_ref, v2_ref, bias_ref, out_ref):
    """One batch tile: three lane-dense GEMMs, no in-kernel relayouts.

    x_ref    : (TB, P*L + S)            raw flat SNO input (f32)
    w1_ref   : (P*L + S, C*HP)          fused input->hidden weight (bf16, block-diagonal;
                                        Chebyshev synthesis + scalar L-broadcast folded in)
    wv_ref   : (C*HP, L*D)              fused (spectral 2nd layer) x (output 1st layer) (bf16)
    v2_ref   : (L*D, L*TO)              block-diagonal output 2nd layer (bf16)
    bias_ref : (1, C*HP + L*D + L*TO)   consolidated fused biases (f32)
    out_ref  : (TB, L*TO)               lane-dense output slab (f32)
    """
    f32 = jnp.float32
    bf = jnp.bfloat16
    CH = w1_ref.shape[1]
    LD = wv_ref.shape[1]
    LT = v2_ref.shape[1]

    b1 = bias_ref[:, :CH]
    c1 = bias_ref[:, CH:CH + LD]
    c2 = bias_ref[:, CH + LD:CH + LD + LT]

    x = x_ref[...].astype(bf)
    h = jnp.dot(x, w1_ref[...], preferred_element_type=f32) + b1
    h = jax.nn.gelu(h, approximate=True)
    o1 = jnp.dot(h.astype(bf), wv_ref[...], preferred_element_type=f32) + c1
    o1 = jax.nn.gelu(o1, approximate=True)
    out_ref[...] = jnp.dot(o1.astype(bf), v2_ref[...], preferred_element_type=f32) + c2


# ------------------------------- wrapper -------------------------------------
def _round_up(a, m):
    return ((a + m - 1) // m) * m


def sno_forward(x_flat, fused, *, P, S, L, TP, TS, block_b=512):
    B, F = x_flat.shape
    TO = TP + TS
    assert F == P * L + S
    W1, WV, V2, bias = fused

    # Batch tile: multiple of 8 sublanes; keep >=2 grid steps when the batch allows it so
    # dimension_semantics=("parallel",) can shard batch blocks across both v7x TensorCores.
    TB = max(8, min(block_b, _round_up(pl.cdiv(B, 2), 8)))
    nb = pl.cdiv(B, TB)
    B_pad = nb * TB
    if B_pad != B:
        x_flat = jnp.pad(x_flat, ((0, B_pad - B), (0, 0)))

    def wspec(shape):
        nd = len(shape)
        return pl.BlockSpec(shape, lambda b, _nd=nd: (0,) * _nd)   # resident weights

    o2 = pl.pallas_call(
        sno_kernel,
        out_shape=jax.ShapeDtypeStruct((B_pad, L * TO), jnp.float32),
        grid_spec=pltpu.PrefetchScalarGridSpec(
            num_scalar_prefetch=0,
            grid=(nb,),
            in_specs=[pl.BlockSpec((TB, F), lambda b: (b, 0)),
                      wspec(W1.shape), wspec(WV.shape),
                      wspec(V2.shape), wspec(bias.shape)],
            out_specs=pl.BlockSpec((TB, L * TO), lambda b: (b, 0)),
        ),
        compiler_params=pltpu.CompilerParams(
            dimension_semantics=("parallel",),
            vmem_limit_bytes=32 * 1024 * 1024),
    )(x_flat, W1, WV, V2, bias)

    # Tiny XLA epilogue on the lane-dense slab: profile transpose + f32 scalar mean over levels.
    o2 = o2[:B].reshape(B, L, TO)
    prof = jnp.swapaxes(o2[:, :, :TP], 1, 2).reshape(B, TP * L)
    scal = jnp.mean(o2[:, :, TP:], axis=1)
    return jnp.concatenate([prof, scal], axis=-1)


# ------------------------------ parameters ------------------------------------
def init_raw_params(key, *, P, S, L, TP, TS, D, H=100):
    """'PyTorch-like' unfused parameters (all f32)."""
    C = P + S
    TO = TP + TS
    # Inverse Chebyshev synthesis at Chebyshev-Gauss nodes:
    #   value_m = sum_k coeff_k * cos(k * theta_m),  theta_m = pi*(2m+1)/(2L)
    k = jnp.arange(L, dtype=jnp.float32)[:, None]
    m = jnp.arange(L, dtype=jnp.float32)[None, :]
    theta = jnp.pi * (2.0 * m + 1.0) / (2.0 * L)
    T = jnp.cos(k * theta)                                      # (L coeff, L node)

    ks = jax.random.split(key, 8)

    def lin(kk, fan_in, shape):
        return jax.random.normal(kk, shape, jnp.float32) / jnp.sqrt(float(fan_in))

    w1 = lin(ks[0], L, (L, H)); b1 = lin(ks[1], L, (H,))
    w2 = lin(ks[2], H, (H, L)); b2 = lin(ks[3], H, (L,))
    v1 = lin(ks[4], C, (C, D)); c1 = lin(ks[5], C, (D,))
    v2 = lin(ks[6], D, (D, TO)); c2 = lin(ks[7], D, (TO,))
    return dict(T=T, w1=w1, b1=b1, w2=w2, b2=b2, v1=v1, c1=c1, v2=v2, c2=c2)


def fuse_params(raw, *, P, S, L, TP, TS, D, H=100):
    """Host-side weight fusion (f32 products, single bf16 cast)."""
    C = P + S
    TO = TP + TS
    T, w1, b1, w2, b2 = raw["T"], raw["w1"], raw["b1"], raw["w2"], raw["b2"]
    v1, c1, v2, c2 = raw["v1"], raw["c1"], raw["v2"], raw["c2"]

    # (1) Chebyshev synthesis fused into the first spectral weight; zero-pad 100 -> 128.
    w1f = jnp.pad(T @ w1, ((0, 0), (0, HP - H)))                # (L, HP)
    b1p = jnp.pad(b1, (0, HP - H))                              # (HP,)
    colsum = jnp.sum(w1f, axis=0)                               # scalar channels are const in L

    # (2) Block-diagonal first layer acting directly on the flat input (P*L profile features
    #     then S scalar features) -> channel-major hidden lanes (c*HP + k).
    top = jnp.concatenate(
        [jnp.kron(jnp.eye(P, dtype=jnp.float32), w1f),
         jnp.zeros((P * L, S * HP), jnp.float32)], axis=1)
    bot = jnp.concatenate(
        [jnp.zeros((S, P * HP), jnp.float32),
         jnp.kron(jnp.eye(S, dtype=jnp.float32), colsum[None, :])], axis=1)
    W1 = jnp.concatenate([top, bot], axis=0)                    # (P*L + S, C*HP)
    b1all = jnp.tile(b1p, C)                                    # (C*HP,)

    # (3) Fuse second spectral layer with first output layer; removes the (C,L) transpose.
    w2p = jnp.pad(w2, ((0, HP - H), (0, 0)))                    # (HP, L)
    WV = jnp.einsum("kl,cd->ckld", w2p, v1).reshape(C * HP, L * D)
    c1f = (c1[None, :] + b2[:, None] * jnp.sum(v1, axis=0)[None, :]).reshape(L * D)

    # (4) Block-diagonal last layer emits the (L*TO) lane-dense output slab directly.
    V2 = jnp.kron(jnp.eye(L, dtype=jnp.float32), v2)            # (L*D, L*TO)
    c2f = jnp.tile(c2, L)                                       # (L*TO,)

    bias = jnp.concatenate([b1all, c1f, c2f])[None, :].astype(jnp.float32)
    return (W1.astype(jnp.bfloat16), WV.astype(jnp.bfloat16),
            V2.astype(jnp.bfloat16), bias)


# ---------------------- pure-JAX f32 unfused reference ------------------------
def sno_reference(x_flat, raw, *, P, S, L, TP, TS):
    """Ground-truth unfused forward pass (validates the host-side weight fusion too)."""
    B = x_flat.shape[0]
    T, w1, b1, w2, b2 = raw["T"], raw["w1"], raw["b1"], raw["w2"], raw["b2"]
    v1, c1, v2, c2 = raw["v1"], raw["c1"], raw["v2"], raw["c2"]

    prof = x_flat[:, :P * L].reshape(B, P, L)
    scal = jnp.broadcast_to(x_flat[:, P * L:][:, :, None], (B, S, L))
    x = jnp.concatenate([prof, scal], axis=1)                   # (B, C, L)

    y = jnp.einsum("bcl,lm->bcm", x, T)                         # inverse Chebyshev synthesis
    h = jax.nn.gelu(jnp.einsum("bcl,lh->bch", y, w1) + b1, approximate=True)
    z = jnp.einsum("bch,hl->bcl", h, w2) + b2
    zt = jnp.swapaxes(z, 1, 2)                                  # (B, L, C)
    o1 = jax.nn.gelu(jnp.einsum("blc,cd->bld", zt, v1) + c1, approximate=True)
    o2 = jnp.einsum("bld,dt->blt", o1, v2) + c2                 # (B, L, TO)

    profo = jnp.swapaxes(o2[:, :, :TP], 1, 2).reshape(B, TP * L)
    scalo = jnp.mean(o2[:, :, TP:], axis=1)
    return jnp.concatenate([profo, scalo], axis=-1)


if __name__ == "__main__":
    # small, forward-consistent sizes
    P, S, L = 4, 3, 16            # input profiles, input scalars, vertical levels
    TP, TS, D = 3, 2, 32          # target profiles, target scalars, out_network_dim
    B = 2

    key = jax.random.PRNGKey(0)
    kx, kp = jax.random.split(key)
    raw = init_raw_params(kp, P=P, S=S, L=L, TP=TP, TS=TS, D=D)
    fused = fuse_params(raw, P=P, S=S, L=L, TP=TP, TS=TS, D=D)

    x = jax.random.normal(kx, (B, P * L + S), jnp.float32)      # flat SNO input

    out = sno_forward(x, fused, P=P, S=S, L=L, TP=TP, TS=TS)
    out = jax.block_until_ready(out)

    ref = sno_reference(x, raw, P=P, S=S, L=L, TP=TP, TS=TS)
    assert out.shape == (B, TP * L + TS), out.shape
    # bf16 fused weights / bf16 GEMM inputs in the kernel vs f32 unfused reference.
    err = float(jnp.max(jnp.abs(out - ref)))
    assert jnp.allclose(out, ref, atol=2e-2, rtol=2e-2), ("mismatch vs reference", err)

    print("KERNEL_OK")
</pallas_src>

<mosaic_0001>
module attributes {stable_mosaic.version = 11 : i64} {
  func.func @sno_kernel(%arg0: i32, %arg1: memref<8x67xf32, #tpu.memory_space<vmem>>, %arg2: memref<67x896xbf16, #tpu.memory_space<vmem>>, %arg3: memref<896x512xbf16, #tpu.memory_space<vmem>>, %arg4: memref<512x80xbf16, #tpu.memory_space<vmem>>, %arg5: memref<1x1488xf32, #tpu.memory_space<vmem>>, %arg6: memref<8x80xf32, #tpu.memory_space<vmem>>) attributes {dimension_semantics = [#tpu.dimension_semantics<parallel>], iteration_bounds = array<i64: 1>, scalar_prefetch = 0 : i64, scratch_operands = 0 : i64, tpu.core_type = #tpu.core_type<tc>, window_params = [{transform_indices = @transform_0, window_bounds = array<i64: 8, 67>}, {pipeline_mode = #tpu.pipeline_mode<synchronous>, transform_indices = @transform_1, window_bounds = array<i64: 67, 896>}, {pipeline_mode = #tpu.pipeline_mode<synchronous>, transform_indices = @transform_2, window_bounds = array<i64: 896, 512>}, {pipeline_mode = #tpu.pipeline_mode<synchronous>, transform_indices = @transform_3, window_bounds = array<i64: 512, 80>}, {pipeline_mode = #tpu.pipeline_mode<synchronous>, transform_indices = @transform_4, window_bounds = array<i64: 1, 1488>}, {transform_indices = @transform_5, window_bounds = array<i64: 8, 80>}]} {
    %c0 = arith.constant 0 : index
    %c0_0 = arith.constant 0 : index
    %0 = vector.load %arg5[%c0, %c0_0] : memref<1x1488xf32, #tpu.memory_space<vmem>>, vector<1x896xf32>
    %c0_1 = arith.constant 0 : index
    %c896 = arith.constant 896 : index
    %1 = vector.load %arg5[%c0_1, %c896] : memref<1x1488xf32, #tpu.memory_space<vmem>>, vector<1x512xf32>
    %c0_2 = arith.constant 0 : index
    %c1408 = arith.constant 1408 : index
    %2 = vector.load %arg5[%c0_2, %c1408] : memref<1x1488xf32, #tpu.memory_space<vmem>>, vector<1x80xf32>
    %c0_3 = arith.constant 0 : index
    %c0_4 = arith.constant 0 : index
    %3 = vector.load %arg1[%c0_3, %c0_4] : memref<8x67xf32, #tpu.memory_space<vmem>>, vector<8x67xf32>
    %4 = arith.truncf %3 : vector<8x67xf32> to vector<8x67xbf16>
    %c0_5 = arith.constant 0 : index
    %c0_6 = arith.constant 0 : index
    %5 = vector.load %arg2[%c0_5, %c0_6] : memref<67x896xbf16, #tpu.memory_space<vmem>>, vector<67x896xbf16>
    %cst = arith.constant dense<0.000000e+00> : vector<8x896xf32>
    %6 = tpu.matmul %4, %5, %cst {dimension_numbers = #tpu.dot_dimension_numbers<[1], [0], [0], [1], [0, 0, 1, 1], [], []>} : vector<8x67xbf16>, vector<67x896xbf16>, vector<8x896xf32> -> vector<8x896xf32>
    %7 = vector.broadcast %0 : vector<1x896xf32> to vector<8x896xf32>
    %8 = arith.addf %6, %7 : vector<8x896xf32>
    %9 = arith.mulf %8, %8 : vector<8x896xf32>
    %10 = arith.mulf %8, %9 : vector<8x896xf32>
    %cst_7 = arith.constant 4.471500e-02 : f32
    %11 = vector.broadcast %cst_7 : f32 to vector<8x896xf32>
    %12 = arith.mulf %11, %10 : vector<8x896xf32>
    %13 = arith.addf %8, %12 : vector<8x896xf32>
    %cst_8 = arith.constant 0.797884583 : f32
    %14 = vector.broadcast %cst_8 : f32 to vector<8x896xf32>
    %15 = arith.mulf %14, %13 : vector<8x896xf32>
    %16 = math.tanh %15 : vector<8x896xf32>
    %cst_9 = arith.constant 1.000000e+00 : f32
    %17 = vector.broadcast %cst_9 : f32 to vector<8x896xf32>
    %18 = arith.addf %17, %16 : vector<8x896xf32>
    %cst_10 = arith.constant 5.000000e-01 : f32
    %19 = vector.broadcast %cst_10 : f32 to vector<8x896xf32>
    %20 = arith.mulf %19, %18 : vector<8x896xf32>
    %21 = arith.mulf %8, %20 : vector<8x896xf32>
    %22 = arith.truncf %21 : vector<8x896xf32> to vector<8x896xbf16>
    %c0_11 = arith.constant 0 : index
    %c0_12 = arith.constant 0 : index
    %23 = vector.load %arg3[%c0_11, %c0_12] : memref<896x512xbf16, #tpu.memory_space<vmem>>, vector<896x512xbf16>
    %cst_13 = arith.constant dense<0.000000e+00> : vector<8x512xf32>
    %24 = tpu.matmul %22, %23, %cst_13 {dimension_numbers = #tpu.dot_dimension_numbers<[1], [0], [0], [1], [0, 0, 1, 1], [], []>} : vector<8x896xbf16>, vector<896x512xbf16>, vector<8x512xf32> -> vector<8x512xf32>
    %25 = vector.broadcast %1 : vector<1x512xf32> to vector<8x512xf32>
    %26 = arith.addf %24, %25 : vector<8x512xf32>
    %27 = arith.mulf %26, %26 : vector<8x512xf32>
    %28 = arith.mulf %26, %27 : vector<8x512xf32>
    %cst_14 = arith.constant 4.471500e-02 : f32
    %29 = vector.broadcast %cst_14 : f32 to vector<8x512xf32>
    %30 = arith.mulf %29, %28 : vector<8x512xf32>
    %31 = arith.addf %26, %30 : vector<8x512xf32>
    %cst_15 = arith.constant 0.797884583 : f32
    %32 = vector.broadcast %cst_15 : f32 to vector<8x512xf32>
    %33 = arith.mulf %32, %31 : vector<8x512xf32>
    %34 = math.tanh %33 : vector<8x512xf32>
    %cst_16 = arith.constant 1.000000e+00 : f32
    %35 = vector.broadcast %cst_16 : f32 to vector<8x512xf32>
    %36 = arith.addf %35, %34 : vector<8x512xf32>
    %cst_17 = arith.constant 5.000000e-01 : f32
    %37 = vector.broadcast %cst_17 : f32 to vector<8x512xf32>
    %38 = arith.mulf %37, %36 : vector<8x512xf32>
    %39 = arith.mulf %26, %38 : vector<8x512xf32>
    %40 = arith.truncf %39 : vector<8x512xf32> to vector<8x512xbf16>
    %c0_18 = arith.constant 0 : index
    %c0_19 = arith.constant 0 : index
    %41 = vector.load %arg4[%c0_18, %c0_19] : memref<512x80xbf16, #tpu.memory_space<vmem>>, vector<512x80xbf16>
    %cst_20 = arith.constant dense<0.000000e+00> : vector<8x80xf32>
    %42 = tpu.matmul %40, %41, %cst_20 {dimension_numbers = #tpu.dot_dimension_numbers<[1], [0], [0], [1], [0, 0, 1, 1], [], []>} : vector<8x512xbf16>, vector<512x80xbf16>, vector<8x80xf32> -> vector<8x80xf32>
    %43 = vector.broadcast %2 : vector<1x80xf32> to vector<8x80xf32>
    %44 = arith.addf %42, %43 : vector<8x80xf32>
    %c0_21 = arith.constant 0 : index
    %c0_22 = arith.constant 0 : index
    %45 = vector.load %arg6[%c0_21, %c0_22] : memref<8x80xf32, #tpu.memory_space<vmem>>, vector<8x80xf32>
    tpu.vector_store %arg6[%c0_21, %c0_22], %44 {strides = array<i32>} : memref<8x80xf32, #tpu.memory_space<vmem>>, vector<8x80xf32>,
    return
  }
  func.func @transform_0(%arg0: i32) -> (i32, i32) {
    %c0_i32 = arith.constant 0 : i32
    %c0_i32_0 = arith.constant 0 : i32
    return %arg0, %c0_i32 : i32, i32
  }
  func.func @transform_1(%arg0: i32) -> (i32, i32) {
    %c0_i32 = arith.constant 0 : i32
    %c0_i32_0 = arith.constant 0 : i32
    %c0_i32_1 = arith.constant 0 : i32
    return %c0_i32, %c0_i32_0 : i32, i32
  }
  func.func @transform_2(%arg0: i32) -> (i32, i32) {
    %c0_i32 = arith.constant 0 : i32
    %c0_i32_0 = arith.constant 0 : i32
    %c0_i32_1 = arith.constant 0 : i32
    return %c0_i32, %c0_i32_0 : i32, i32
  }
  func.func @transform_3(%arg0: i32) -> (i32, i32) {
    %c0_i32 = arith.constant 0 : i32
    %c0_i32_0 = arith.constant 0 : i32
    %c0_i32_1 = arith.constant 0 : i32
    return %c0_i32, %c0_i32_0 : i32, i32
  }
  func.func @transform_4(%arg0: i32) -> (i32, i32) {
    %c0_i32 = arith.constant 0 : i32
    %c0_i32_0 = arith.constant 0 : i32
    %c0_i32_1 = arith.constant 0 : i32
    return %c0_i32, %c0_i32_0 : i32, i32
  }
  func.func @transform_5(%arg0: i32) -> (i32, i32) {
    %c0_i32 = arith.constant 0 : i32
    %c0_i32_0 = arith.constant 0 : i32
    return %arg0, %c0_i32 : i32, i32
  }
}

</mosaic_0001>

<llo_original>
// kernel: tpu_custom_call.1
$region0: #{tpu_custom_call.1}
  #allocation0 [shape = 'u32[]', space=smem, size = 0x4, offset = 0x4, fixed_abs, tag = 'smem constant byte address 0x4 - core index']
  #allocation1 [shape = 'u32[144,128]{1,0:T(1,128)}', space=vmem, size = 0x12000, scoped, tag = 'internal scratch']
  %s0 = inlined_call_operand.vmem [shape: f32[8,67], index: 0, kind: input, shape index: {}]
  %s1 = inlined_call_operand.vmem [shape: bf16[67,896], index: 1, kind: input, shape index: {}]
  %s2 = inlined_call_operand.hbm [shape: bf16[896,512], index: 2, kind: input, shape index: {}]
  %s3 = inlined_call_operand.vmem [shape: bf16[512,80], index: 3, kind: input, shape index: {}]
  %s4 = inlined_call_operand.vmem [shape: f32[1,1488], index: 4, kind: input, shape index: {}]
  %s5 = inlined_call_operand.hbm [shape: f32[8,80], index: 5, kind: output, shape index: {}]
  %s6 = sld [smem:[#allocation0]]
  $region34: #{tpu_custom_call.1} parent=0
    _
  %s8 = ssub.s32 1, %s6
  %s9 = scalar_select 0, %s8, %s6
  $region1: #{tpu_custom_call.1} parent=0
    #allocation2 [shape = 'u8[917504]{0}', space=vmem, size = 0xe0000, scoped, tag = 'input window, operand 2, single buffered']
    #allocation3 [shape = 's32[1]{0}', space=sflag, size = 0x4, scoped, tag = 'scoped memory for tpu_custom_call.1']
    #allocation4 [shape = 's32[1]{0}', space=sflag, size = 0x4, scoped, tag = 'scoped memory for tpu_custom_call.1']
    #allocation5 [shape = 'u8[4096]{0}', space=vmem, size = 0x1000, scoped, tag = 'output window, operand 0, single buffered']
    %10 = vsyncpa [#allocation3], 0
    %11 = vsyncpa [#allocation4], 0
    // Predicated region
    $region2: #{tpu_custom_call.1} parent=1 // pred_check
      _
    $region3: #{tpu_custom_call.1} parent=1 // pred_check_branch
      %13 = sbr.rel (0) target = $region5
    $region4: #{tpu_custom_call.1} parent=1 // pred_region
      _
    $region5: #{tpu_custom_call.1} parent=1 // pred_fallthru
      _
    // Predicated region
    $region6: #{tpu_custom_call.1} parent=1 // pred_check
      _
    $region7: #{tpu_custom_call.1} parent=1 // pred_check_branch
      %15 = sbr.rel (0) target = $region9
    $region8: #{tpu_custom_call.1} parent=1 // pred_region
      _
    $region9: #{tpu_custom_call.1} parent=1 // pred_fallthru
      _
    // Predicated region
    $region10: #{tpu_custom_call.1} parent=1 // pred_check
      _
    $region11: #{tpu_custom_call.1} parent=1 // pred_check_branch
      %17 = sbr.rel (0) target = $region13
    $region12: #{tpu_custom_call.1} parent=1 // pred_region
      %s19 = ssub.s32 28672, 28672
      %20 = vsyncadd [#allocation3], %s19
      %s21 = sshll.u32 [#allocation2], 4
      %s22 = int_to_ptr.vmem [resolvable:$true] %s21
      %27 = dma.hbm_to_vmem [thread:$0]  %s2, 28672, %s22, [#allocation3], 256, 256, 16
    $region13: #{tpu_custom_call.1} parent=1 // pred_fallthru
      _
    // Predicated region
    $region14: #{tpu_custom_call.1} parent=1 // pred_check
      _
    $region15: #{tpu_custom_call.1} parent=1 // pred_check_branch
      %29 = sbr.rel (0) target = $region17
    $region16: #{tpu_custom_call.1} parent=1 // pred_region
      _
    $region17: #{tpu_custom_call.1} parent=1 // pred_fallthru
      _
    // Predicated region
    $region18: #{tpu_custom_call.1} parent=1 // pred_check
      _
    $region19: #{tpu_custom_call.1} parent=1 // pred_check_branch
      %31 = sbr.rel (0) target = $region21
    $region20: #{tpu_custom_call.1} parent=1 // pred_region
      _
    $region21: #{tpu_custom_call.1} parent=1 // pred_fallthru
      _
    // Predicated region
    $region22: #{tpu_custom_call.1} parent=1 // pred_check
      _
    $region23: #{tpu_custom_call.1} parent=1 // pred_check_branch
      %33 = sbr.rel (0) target = $region25
    $region24: #{tpu_custom_call.1} parent=1 // pred_region
      %34 = dma.done [#allocation3], 28672
    $region25: #{tpu_custom_call.1} parent=1 // pred_fallthru
      _
    %v36 = vld [vmem:[%s4] sm:$0xff]
    %v37 = vld [vmem:[%s4 + $0x7] sm:$0xf]
    %v38 = vld [vmem:[%s4 + $0xb] sm:$0x1]
    %v39 = vld [vmem:[%s0] sm:$0xff]
    %v40 = vpack.c.bf16 %v39, %v39
    %v41 = vld [vmem:[%s1] sm:$0xff]
    %v42 = vld [vmem:[%s1 + $0x8] sm:$0xff]
    %v43 = vld [vmem:[%s1 + $0x10] sm:$0xff]
    %v44 = vld [vmem:[%s1 + $0x18] sm:$0xf]
    %v45 = vld [vmem:[%s1 + $0x1c] sm:$0xff]
    %v46 = vld [vmem:[%s1 + $0x24] sm:$0xff]
    %v47 = vld [vmem:[%s1 + $0x2c] sm:$0xff]
    %v48 = vld [vmem:[%s1 + $0x34] sm:$0xf]
    %v49 = vld [vmem:[%s1 + $0x38] sm:$0xff]
    %v50 = vld [vmem:[%s1 + $0x40] sm:$0xff]
    %v51 = vld [vmem:[%s1 + $0x48] sm:$0xff]
    %v52 = vld [vmem:[%s1 + $0x50] sm:$0xf]
    %v53 = vld [vmem:[%s1 + $0x54] sm:$0xff]
    %v54 = vld [vmem:[%s1 + $0x5c] sm:$0xff]
    %v55 = vld [vmem:[%s1 + $0x64] sm:$0xff]
    %v56 = vld [vmem:[%s1 + $0x6c] sm:$0xf]
    %v57 = vld [vmem:[%s1 + $0x70] sm:$0xff]
    %v58 = vld [vmem:[%s1 + $0x78] sm:$0xff]
    %v59 = vld [vmem:[%s1 + $0x80] sm:$0xff]
    %v60 = vld [vmem:[%s1 + $0x88] sm:$0xf]
    %v61 = vld [vmem:[%s1 + $0x8c] sm:$0xff]
    %v62 = vld [vmem:[%s1 + $0x94] sm:$0xff]
    %v63 = vld [vmem:[%s1 + $0x9c] sm:$0xff]
    %v64 = vld [vmem:[%s1 + $0xa4] sm:$0xf]
    %v65 = vld [vmem:[%s1 + $0xa8] sm:$0xff]
    %v66 = vld [vmem:[%s1 + $0xb0] sm:$0xff]
    %v67 = vld [vmem:[%s1 + $0xb8] sm:$0xff]
    %v68 = vld [vmem:[%s1 + $0xc0] sm:$0xf]
    %v69 = vld [vmem:[%s1 + $0xc4] sm:$0xff]
    %v70 = vld [vmem:[%s1 + $0xcc] sm:$0xff]
    %v71 = vld [vmem:[%s1 + $0xd4] sm:$0xff]
    %v72 = vld [vmem:[%s1 + $0xdc] sm:$0xf]
    %v73 = vld [vmem:[%s1 + $0xe0] sm:$0x33]
    %v74 = vld [vmem:[%s1 + $0xe8] sm:$0x33]
    %v75 = vld [vmem:[%s1 + $0xf0] sm:$0x33]
    %v76 = vld [vmem:[%s1 + $0xf8] sm:$0x3]
    %v78 = vlaneseq
    %v79 = vshrl.u32 %v78, 7
    %v80 = vsub.s32 0, %v79
    %v81 = vrot.slane %v36, %v80
    %v82 = vlaneseq
    %v83 = vshrl.u32 %v82, 7
    %v84 = vsub.s32 1, %v83
    %v85 = vrot.slane %v36, %v84
    %v86 = vlaneseq
    %v87 = vshrl.u32 %v86, 7
    %v88 = vsub.s32 2, %v87
    %v89 = vrot.slane %v36, %v88
    %v90 = vlaneseq
    %v91 = vshrl.u32 %v90, 7
    %v92 = vsub.s32 3, %v91
    %v93 = vrot.slane %v36, %v92
    %v94 = vlaneseq
    %v95 = vshrl.u32 %v94, 7
    %v96 = vsub.s32 4, %v95
    %v97 = vrot.slane %v36, %v96
    %v98 = vlaneseq
    %v99 = vshrl.u32 %v98, 7
    %v100 = vsub.s32 5, %v99
    %v101 = vrot.slane %v36, %v100
    %v102 = vlaneseq
    %v103 = vshrl.u32 %v102, 7
    %v104 = vsub.s32 6, %v103
    %v105 = vrot.slane %v36, %v104
    %v149 = vunpack.c.l.b16 %v41
    %v150 = vunpack.c.h.b16 %v41
    %v151 = vunpack.c.l.b16 %v42
    %v152 = vunpack.c.h.b16 %v42
    %v153 = vunpack.c.l.b16 %v43
    %v154 = vunpack.c.h.b16 %v43
    %v155 = vunpack.c.l.b16 %v44
    %v156 = vunpack.c.l.b16 %v45
    %v157 = vunpack.c.h.b16 %v45
    %v158 = vunpack.c.l.b16 %v46
    %v159 = vunpack.c.h.b16 %v46
    %v160 = vunpack.c.l.b16 %v47
    %v161 = vunpack.c.h.b16 %v47
    %v162 = vunpack.c.l.b16 %v48
    %v163 = vunpack.c.l.b16 %v49
    %v164 = vunpack.c.h.b16 %v49
    %v165 = vunpack.c.l.b16 %v50
    %v166 = vunpack.c.h.b16 %v50
    %v167 = vunpack.c.l.b16 %v51
    %v168 = vunpack.c.h.b16 %v51
    %v169 = vunpack.c.l.b16 %v52
    %v170 = vunpack.c.l.b16 %v53
    %v171 = vunpack.c.h.b16 %v53
    %v172 = vunpack.c.l.b16 %v54
    %v173 = vunpack.c.h.b16 %v54
    %v174 = vunpack.c.l.b16 %v55
    %v175 = vunpack.c.h.b16 %v55
    %v176 = vunpack.c.l.b16 %v56
    %v177 = vunpack.c.l.b16 %v57
    %v178 = vunpack.c.h.b16 %v57
    %v179 = vunpack.c.l.b16 %v58
    %v180 = vunpack.c.h.b16 %v58
    %v181 = vunpack.c.l.b16 %v59
    %v182 = vunpack.c.h.b16 %v59
    %v183 = vunpack.c.l.b16 %v60
    %v184 = vunpack.c.l.b16 %v61
    %v185 = vunpack.c.h.b16 %v61
    %v186 = vunpack.c.l.b16 %v62
    %v187 = vunpack.c.h.b16 %v62
    %v188 = vunpack.c.l.b16 %v63
    %v189 = vunpack.c.h.b16 %v63
    %v190 = vunpack.c.l.b16 %v64
    %v191 = vunpack.c.l.b16 %v65
    %v192 = vunpack.c.h.b16 %v65
    %v193 = vunpack.c.l.b16 %v66
    %v194 = vunpack.c.h.b16 %v66
    %v195 = vunpack.c.l.b16 %v67
    %v196 = vunpack.c.h.b16 %v67
    %v197 = vunpack.c.l.b16 %v68
    %v198 = vunpack.c.l.b16 %v69
    %v199 = vunpack.c.h.b16 %v69
    %v200 = vunpack.c.l.b16 %v70
    %v201 = vunpack.c.h.b16 %v70
    %v202 = vunpack.c.l.b16 %v71
    %v203 = vunpack.c.h.b16 %v71
    %v204 = vunpack.c.l.b16 %v72
    %v205 = vunpack.c.l.b16 %v73
    %v206 = vunpack.c.h.b16 %v73
    %v207 = vunpack.c.l.b16 %v74
    %v208 = vunpack.c.h.b16 %v74
    %v209 = vunpack.c.l.b16 %v75
    %v210 = vunpack.c.h.b16 %v75
    %v211 = vunpack.c.l.b16 %v76
    %v212 = vpack.c.b16 %v156, %v149
    %v213 = vpack.c.b16 %v157, %v150
    %v214 = vpack.c.b16 %v158, %v151
    %v215 = vpack.c.b16 %v159, %v152
    %v216 = vpack.c.b16 %v160, %v153
    %v217 = vpack.c.b16 %v161, %v154
    %v218 = vpack.c.b16 %v162, %v155
    %v219 = vpack.c.b16 %v170, %v163
    %v220 = vpack.c.b16 %v171, %v164
    %v221 = vpack.c.b16 %v172, %v165
    %v222 = vpack.c.b16 %v173, %v166
    %v223 = vpack.c.b16 %v174, %v167
    %v224 = vpack.c.b16 %v175, %v168
    %v225 = vpack.c.b16 %v176, %v169
    %v226 = vpack.c.b16 %v184, %v177
    %v227 = vpack.c.b16 %v185, %v178
    %v228 = vpack.c.b16 %v186, %v179
    %v229 = vpack.c.b16 %v187, %v180
    %v230 = vpack.c.b16 %v188, %v181
    %v231 = vpack.c.b16 %v189, %v182
    %v232 = vpack.c.b16 %v190, %v183
    %v233 = vpack.c.b16 %v198, %v191
    %v234 = vpack.c.b16 %v199, %v192
    %v235 = vpack.c.b16 %v200, %v193
    %v236 = vpack.c.b16 %v201, %v194
    %v237 = vpack.c.b16 %v202, %v195
    %v238 = vpack.c.b16 %v203, %v196
    %v239 = vpack.c.b16 %v204, %v197
    %v240 = vpack.c.b16 %v205, %v205
    %v241 = vpack.c.b16 %v206, %v206
    %v242 = vpack.c.b16 %v207, %v207
    %v243 = vpack.c.b16 %v208, %v208
    %v244 = vpack.c.b16 %v209, %v209
    %v245 = vpack.c.b16 %v210, %v210
    %v246 = vpack.c.b16 %v211, %v211
    %vm275 = vcmask 547840
    %v277 = vsel %vm275, %v40, 0
    %vm279 = vcmask 1040384
    %vm280 = vcmask 1041408
    %v281 = vsel %vm279, 4294967295, 65535
    %v282 = vsel %vm280, %v281, 0
    %v284 = vand.u32 %v240, %v282
    %v287 = vand.u32 %v241, %v282
    %v290 = vand.u32 %v242, %v282
    %v293 = vand.u32 %v243, %v282
    %v296 = vand.u32 %v244, %v282
    %v299 = vand.u32 %v245, %v282
    %v302 = vand.u32 %v246, %v282
    %304 = vmatprep.subr.bf16.mxu0 %v213
    %305 = vmatpush1.bf16.msra.mxu0 %v212
    %306 = vmatprep.subr.bf16.mxu0 %v220
    %307 = vmatpush1.bf16.msra.mxu0 %v219
    %308 = vmatprep.subr.bf16.mxu0 %v227
    %309 = vmatpush1.bf16.msra.mxu0 %v226
    %310 = vmatprep.subr.bf16.mxu0 %v234
    %311 = vmatpush1.bf16.msra.mxu0 %v233
    %312 = vmatprep.subr.bf16.mxu0 %v287
    %313 = vmatpush1.bf16.msra.mxu0 %v284
    %314 = vmatprep.subr.bf16.mxu0 0
    %315 = vmatpush1.bf16.msra.mxu0 0
    %316 = vmatprep.subr.bf16.mxu0 0
    %317 = vmatpush1.bf16.msra.mxu0 0
    %318 = vmatprep.subr.bf16.mxu0 0
    %319 = vmatpush1.bf16.msra.mxu0 0
    %320 = vmatprep.subr.bf16.mxu0 0
    %321 = vmatpush1.bf16.msra.mxu0 0
    %322 = vmatprep.subr.bf16.mxu0 0
    %323 = vmatpush1.bf16.msra.mxu0 0
    %324 = vmatprep.subr.bf16.mxu0 0
    %325 = vmatpush1.bf16.msra.mxu0 0
    %326 = vmatprep.subr.bf16.mxu0 0
    %327 = vmatpush1.bf16.msra.mxu0 0
    %328 = vmatprep.subr.bf16.mxu0 0
    %329 = vmatpush1.bf16.msra.mxu0 0
    %330 = vmatprep.subr.bf16.mxu0 0
    %331 = vmatpush1.bf16.msra.mxu0 0
    %332 = vmatprep.subr.bf16.mxu0 0
    %333 = vmatpush1.bf16.msra.mxu0 0
    %334 = vmatprep.subr.bf16.mxu0 0
    %335 = vmatpush1.bf16.msra.mxu0 0
    %336 = vmatprep.mubr.bf16.mxu0 0
    %337 = vmatmul.mubr.bf16.gmra.mrb[0].mxu0 %v277
    %v338 = vpop.f32.mrb[0].mxu0
    %v339 = vadd.f32 %v81, %v338
    %v340 = vpop.f32.mrb[0].mxu0
    %v341 = vadd.f32 %v85, %v340
    %v342 = vpop.f32.mrb[0].mxu0
    %v343 = vpop.f32.mrb[0].mxu0
    %344 = vdwg.mxu0
    %345 = vmatprep.subr.bf16.mxu0 %v215
    %346 = vmatpush1.bf16.msra.mxu0 %v214
    %347 = vmatprep.subr.bf16.mxu0 %v222
    %348 = vmatpush1.bf16.msra.mxu0 %v221
    %349 = vmatprep.subr.bf16.mxu0 %v229
    %350 = vmatpush1.bf16.msra.mxu0 %v228
    %351 = vmatprep.subr.bf16.mxu0 %v236
    %352 = vmatpush1.bf16.msra.mxu0 %v235
    %353 = vmatprep.subr.bf16.mxu0 %v293
    %354 = vmatpush1.bf16.msra.mxu0 %v290
    %355 = vmatprep.subr.bf16.mxu0 0
    %356 = vmatpush1.bf16.msra.mxu0 0
    %357 = vmatprep.subr.bf16.mxu0 0
    %358 = vmatpush1.bf16.msra.mxu0 0
    %359 = vmatprep.subr.bf16.mxu0 0
    %360 = vmatpush1.bf16.msra.mxu0 0
    %361 = vmatprep.subr.bf16.mxu0 0
    %362 = vmatpush1.bf16.msra.mxu0 0
    %363 = vmatprep.subr.bf16.mxu0 0
    %364 = vmatpush1.bf16.msra.mxu0 0
    %365 = vmatprep.subr.bf16.mxu0 0
    %366 = vmatpush1.bf16.msra.mxu0 0
    %367 = vmatprep.subr.bf16.mxu0 0
    %368 = vmatpush1.bf16.msra.mxu0 0
    %369 = vmatprep.subr.bf16.mxu0 0
    %370 = vmatpush1.bf16.msra.mxu0 0
    %371 = vmatprep.subr.bf16.mxu0 0
    %372 = vmatpush1.bf16.msra.mxu0 0
    %373 = vmatprep.subr.bf16.mxu0 0
    %374 = vmatpush1.bf16.msra.mxu0 0
    %375 = vmatprep.subr.bf16.mxu0 0
    %376 = vmatpush1.bf16.msra.mxu0 0
    %377 = vmatprep.mubr.bf16.mxu0 0
    %378 = vmatmul.mubr.bf16.gmra.mrb[0].mxu0 %v277
    %v379 = vpop.f32.mrb[0].mxu0
    %v380 = vadd.f32 %v89, %v379
    %v381 = vpop.f32.mrb[0].mxu0
    %v382 = vadd.f32 %v93, %v381
    %v383 = vpop.f32.mrb[0].mxu0
    %v384 = vpop.f32.mrb[0].mxu0
    %385 = vdwg.mxu0
    %386 = vmatprep.subr.bf16.mxu0 %v217
    %387 = vmatpush1.bf16.msra.mxu0 %v216
    %388 = vmatprep.subr.bf16.mxu0 %v224
    %389 = vmatpush1.bf16.msra.mxu0 %v223
    %390 = vmatprep.subr.bf16.mxu0 %v231
    %391 = vmatpush1.bf16.msra.mxu0 %v230
    %392 = vmatprep.subr.bf16.mxu0 %v238
    %393 = vmatpush1.bf16.msra.mxu0 %v237
    %394 = vmatprep.subr.bf16.mxu0 %v299
    %395 = vmatpush1.bf16.msra.mxu0 %v296
    %396 = vmatprep.subr.bf16.mxu0 0
    %397 = vmatpush1.bf16.msra.mxu0 0
    %398 = vmatprep.subr.bf16.mxu0 0
    %399 = vmatpush1.bf16.msra.mxu0 0
    %400 = vmatprep.subr.bf16.mxu0 0
    %401 = vmatpush1.bf16.msra.mxu0 0
    %402 = vmatprep.subr.bf16.mxu0 0
    %403 = vmatpush1.bf16.msra.mxu0 0
    %404 = vmatprep.subr.bf16.mxu0 0
    %405 = vmatpush1.bf16.msra.mxu0 0
    %406 = vmatprep.subr.bf16.mxu0 0
    %407 = vmatpush1.bf16.msra.mxu0 0
    %408 = vmatprep.subr.bf16.mxu0 0
    %409 = vmatpush1.bf16.msra.mxu0 0
    %410 = vmatprep.subr.bf16.mxu0 0
    %411 = vmatpush1.bf16.msra.mxu0 0
    %412 = vmatprep.subr.bf16.mxu0 0
    %413 = vmatpush1.bf16.msra.mxu0 0
    %414 = vmatprep.subr.bf16.mxu0 0
    %415 = vmatpush1.bf16.msra.mxu0 0
    %416 = vmatprep.subr.bf16.mxu0 0
    %417 = vmatpush1.bf16.msra.mxu0 0
    %418 = vmatprep.mubr.bf16.mxu0 0
    %419 = vmatmul.mubr.bf16.gmra.mrb[0].mxu0 %v277
    %v420 = vpop.f32.mrb[0].mxu0
    %v421 = vadd.f32 %v97, %v420
    %v422 = vpop.f32.mrb[0].mxu0
    %v423 = vadd.f32 %v101, %v422
    %v424 = vpop.f32.mrb[0].mxu0
    %v425 = vpop.f32.mrb[0].mxu0
    %426 = vdwg.mxu0
    %427 = vmatprep.subr.bf16.mxu0 0
    %428 = vmatpush1.bf16.msra.mxu0 %v218
    %429 = vmatprep.subr.bf16.mxu0 0
    %430 = vmatpush1.bf16.msra.mxu0 %v225
    %431 = vmatprep.subr.bf16.mxu0 0
    %432 = vmatpush1.bf16.msra.mxu0 %v232
    %433 = vmatprep.subr.bf16.mxu0 0
    %434 = vmatpush1.bf16.msra.mxu0 %v239
    %435 = vmatprep.subr.bf16.mxu0 0
    %436 = vmatpush1.bf16.msra.mxu0 %v302
    %437 = vmatprep.subr.bf16.mxu0 0
    %438 = vmatpush1.bf16.msra.mxu0 0
    %439 = vmatprep.subr.bf16.mxu0 0
    %440 = vmatpush1.bf16.msra.mxu0 0
    %441 = vmatprep.subr.bf16.mxu0 0
    %442 = vmatpush1.bf16.msra.mxu0 0
    %443 = vmatprep.subr.bf16.mxu0 0
    %444 = vmatpush1.bf16.msra.mxu0 0
    %445 = vmatprep.subr.bf16.mxu0 0
    %446 = vmatpush1.bf16.msra.mxu0 0
    %447 = vmatprep.subr.bf16.mxu0 0
    %448 = vmatpush1.bf16.msra.mxu0 0
    %449 = vmatprep.subr.bf16.mxu0 0
    %450 = vmatpush1.bf16.msra.mxu0 0
    %451 = vmatprep.subr.bf16.mxu0 0
    %452 = vmatpush1.bf16.msra.mxu0 0
    %453 = vmatprep.subr.bf16.mxu0 0
    %454 = vmatpush1.bf16.msra.mxu0 0
    %455 = vmatprep.subr.bf16.mxu0 0
    %456 = vmatpush1.bf16.msra.mxu0 0
    %457 = vmatprep.subr.bf16.mxu0 0
    %458 = vmatpush1.bf16.msra.mxu0 0
    %459 = vmatprep.mubr.bf16.mxu0 0
    %460 = vmatmul.mubr.bf16.gmra.mrb[0].mxu0 %v277
    %v461 = vpop.f32.mrb[0].mxu0
    %v462 = vadd.f32 %v105, %v461
    %v463 = vpop.f32.mrb[0].mxu0
    %v464 = vpop.f32.mrb[0].mxu0
    %v465 = vpop.f32.mrb[0].mxu0
    %466 = vdwg.mxu0
    %v467 = vmul.f32 %v339, %v339
    %v468 = vmul.f32 %v341, %v341
    %v469 = vmul.f32 %v380, %v380
    %v470 = vmul.f32 %v382, %v382
    %v471 = vmul.f32 %v421, %v421
    %v472 = vmul.f32 %v423, %v423
    %v473 = vmul.f32 %v462, %v462
    %v474 = vmul.f32 %v339, %v467
    %v475 = vmul.f32 %v341, %v468
    %v476 = vmul.f32 %v380, %v469
    %v477 = vmul.f32 %v382, %v470
    %v478 = vmul.f32 %v421, %v471
    %v479 = vmul.f32 %v423, %v472
    %v480 = vmul.f32 %v462, %v473
    %v481 = vmul.f32 %v474, 0.044715
    %v482 = vmul.f32 %v475, 0.044715
    %v483 = vmul.f32 %v476, 0.044715
    %v484 = vmul.f32 %v477, 0.044715
    %v485 = vmul.f32 %v478, 0.044715
    %v486 = vmul.f32 %v479, 0.044715
    %v487 = vmul.f32 %v480, 0.044715
    %v488 = vadd.f32 %v339, %v481
    %v489 = vadd.f32 %v341, %v482
    %v490 = vadd.f32 %v380, %v483
    %v491 = vadd.f32 %v382, %v484
    %v492 = vadd.f32 %v421, %v485
    %v493 = vadd.f32 %v423, %v486
    %v494 = vadd.f32 %v462, %v487
    %v495 = vmul.f32 %v488, 0.7978846
    %v496 = vmul.f32 %v489, 0.7978846
    %v497 = vmul.f32 %v490, 0.7978846
    %v498 = vmul.f32 %v491, 0.7978846
    %v499 = vmul.f32 %v492, 0.7978846
    %v500 = vmul.f32 %v493, 0.7978846
    %v501 = vmul.f32 %v494, 0.7978846
    %v502 = vtanh.pop %v495
    %v503 = vtanh.pop %v496
    %v504 = vtanh.pop %v497
    %v505 = vtanh.pop %v498
    %v506 = vtanh.pop %v499
    %v507 = vtanh.pop %v500
    %v508 = vtanh.pop %v501
    %v509 = vadd.f32 %v502, 1.0
    %v510 = vadd.f32 %v503, 1.0
    %v511 = vadd.f32 %v504, 1.0
    %v512 = vadd.f32 %v505, 1.0
    %v513 = vadd.f32 %v506, 1.0
    %v514 = vadd.f32 %v507, 1.0
    %v515 = vadd.f32 %v508, 1.0
    %v516 = vmul.f32 %v509, 0.5
    %v517 = vmul.f32 %v510, 0.5
    %v518 = vmul.f32 %v511, 0.5
    %v519 = vmul.f32 %v512, 0.5
    %v520 = vmul.f32 %v513, 0.5
    %v521 = vmul.f32 %v514, 0.5
    %v522 = vmul.f32 %v515, 0.5
    %v523 = vmul.f32 %v339, %v516
    %v524 = vmul.f32 %v341, %v517
    %v525 = vmul.f32 %v380, %v518
    %v526 = vmul.f32 %v382, %v519
    %v527 = vmul.f32 %v421, %v520
    %v528 = vmul.f32 %v423, %v521
    %v529 = vmul.f32 %v462, %v522
    %v530 = vpack.c.bf16 %v523, %v523
    %v531 = vpack.c.bf16 %v524, %v524
    %v532 = vpack.c.bf16 %v525, %v525
    %v533 = vpack.c.bf16 %v526, %v526
    %v534 = vpack.c.bf16 %v527, %v527
    %v535 = vpack.c.bf16 %v528, %v528
    %v536 = vpack.c.bf16 %v529, %v529
    %v537 = vld [vmem:[#allocation2] sm:$0xff]
    %v538 = vld [vmem:[#allocation2 + $0x8] sm:$0xff]
    %v539 = vld [vmem:[#allocation2 + $0x10] sm:$0xff]
    %v540 = vld [vmem:[#allocation2 + $0x18] sm:$0xff]
    %v541 = vld [vmem:[#allocation2 + $0x20] sm:$0xff]
    %v542 = vld [vmem:[#allocation2 + $0x28] sm:$0xff]
    %v543 = vld [vmem:[#allocation2 + $0x30] sm:$0xff]
    %v544 = vld [vmem:[#allocation2 + $0x38] sm:$0xff]
    %v545 = vld [vmem:[#allocation2 + $0x40] sm:$0xff]
    %v546 = vld [vmem:[#allocation2 + $0x48] sm:$0xff]
    %v547 = vld [vmem:[#allocation2 + $0x50] sm:$0xff]
    %v548 = vld [vmem:[#allocation2 + $0x58] sm:$0xff]
    %v549 = vld [vmem:[#allocation2 + $0x60] sm:$0xff]
    %v550 = vld [vmem:[#allocation2 + $0x68] sm:$0xff]
    %v551 = vld [vmem:[#allocation2 + $0x70] sm:$0xff]
    %v552 = vld [vmem:[#allocation2 + $0x78] sm:$0xff]
    %v553 = vld [vmem:[#allocation2 + $0x80] sm:$0xff]
    %v554 = vld [vmem:[#allocation2 + $0x88] sm:$0xff]
    %v555 = vld [vmem:[#allocation2 + $0x90] sm:$0xff]
    %v556 = vld [vmem:[#allocation2 + $0x98] sm:$0xff]
    %v557 = vld [vmem:[#allocation2 + $0xa0] sm:$0xff]
    %v558 = vld [vmem:[#allocation2 + $0xa8] sm:$0xff]
    %v559 = vld [vmem:[#allocation2 + $0xb0] sm:$0xff]
    %v560 = vld [vmem:[#allocation2 + $0xb8] sm:$0xff]
    %v561 = vld [vmem:[#allocation2 + $0xc0] sm:$0xff]
    %v562 = vld [vmem:[#allocation2 + $0xc8] sm:$0xff]
    %v563 = vld [vmem:[#allocation2 + $0xd0] sm:$0xff]
    %v564 = vld [vmem:[#allocation2 + $0xd8] sm:$0xff]
    %v565 = vld [vmem:[#allocation2 + $0xe0] sm:$0xff]
    %v566 = vld [vmem:[#allocation2 + $0xe8] sm:$0xff]
    %v567 = vld [vmem:[#allocation2 + $0xf0] sm:$0xff]
    %v568 = vld [vmem:[#allocation2 + $0xf8] sm:$0xff]
    %v569 = vld [vmem:[#allocation2 + $0x100] sm:$0xff]
    %v570 = vld [vmem:[#allocation2 + $0x108] sm:$0xff]
    %v571 = vld [vmem:[#allocation2 + $0x110] sm:$0xff]
    %v572 = vld [vmem:[#allocation2 + $0x118] sm:$0xff]
    %v573 = vld [vmem:[#allocation2 + $0x120] sm:$0xff]
    %v574 = vld [vmem:[#allocation2 + $0x128] sm:$0xff]
    %v575 = vld [vmem:[#allocation2 + $0x130] sm:$0xff]
    %v576 = vld [vmem:[#allocation2 + $0x138] sm:$0xff]
    %v577 = vld [vmem:[#allocation2 + $0x140] sm:$0xff]
    %v578 = vld [vmem:[#allocation2 + $0x148] sm:$0xff]
    %v579 = vld [vmem:[#allocation2 + $0x150] sm:$0xff]
    %v580 = vld [vmem:[#allocation2 + $0x158] sm:$0xff]
    %v581 = vld [vmem:[#allocation2 + $0x160] sm:$0xff]
    %v582 = vld [vmem:[#allocation2 + $0x168] sm:$0xff]
    %v583 = vld [vmem:[#allocation2 + $0x170] sm:$0xff]
    %v584 = vld [vmem:[#allocation2 + $0x178] sm:$0xff]
    %v585 = vld [vmem:[#allocation2 + $0x180] sm:$0xff]
    %v586 = vld [vmem:[#allocation2 + $0x188] sm:$0xff]
    %v587 = vld [vmem:[#allocation2 + $0x190] sm:$0xff]
    %v588 = vld [vmem:[#allocation2 + $0x198] sm:$0xff]
    %v589 = vld [vmem:[#allocation2 + $0x1a0] sm:$0xff]
    %v590 = vld [vmem:[#allocation2 + $0x1a8] sm:$0xff]
    %v591 = vld [vmem:[#allocation2 + $0x1b0] sm:$0xff]
    %v592 = vld [vmem:[#allocation2 + $0x1b8] sm:$0xff]
    %v593 = vld [vmem:[#allocation2 + $0x1c0] sm:$0xff]
    %v594 = vld [vmem:[#allocation2 + $0x1c8] sm:$0xff]
    %v595 = vld [vmem:[#allocation2 + $0x1d0] sm:$0xff]
    %v596 = vld [vmem:[#allocation2 + $0x1d8] sm:$0xff]
    %v597 = vld [vmem:[#allocation2 + $0x1e0] sm:$0xff]
    %v598 = vld [vmem:[#allocation2 + $0x1e8] sm:$0xff]
    %v599 = vld [vmem:[#allocation2 + $0x1f0] sm:$0xff]
    %v600 = vld [vmem:[#allocation2 + $0x1f8] sm:$0xff]
    %v601 = vld [vmem:[#allocation2 + $0x200] sm:$0xff]
    %v602 = vld [vmem:[#allocation2 + $0x208] sm:$0xff]
    %v603 = vld [vmem:[#allocation2 + $0x210] sm:$0xff]
    %v604 = vld [vmem:[#allocation2 + $0x218] sm:$0xff]
    %v605 = vld [vmem:[#allocation2 + $0x220] sm:$0xff]
    %v606 = vld [vmem:[#allocation2 + $0x228] sm:$0xff]
    %v607 = vld [vmem:[#allocation2 + $0x230] sm:$0xff]
    %v608 = vld [vmem:[#allocation2 + $0x238] sm:$0xff]
    %v609 = vld [vmem:[#allocation2 + $0x240] sm:$0xff]
    %v610 = vld [vmem:[#allocation2 + $0x248] sm:$0xff]
    %v611 = vld [vmem:[#allocation2 + $0x250] sm:$0xff]
    %v612 = vld [vmem:[#allocation2 + $0x258] sm:$0xff]
    %v613 = vld [vmem:[#allocation2 + $0x260] sm:$0xff]
    %v614 = vld [vmem:[#allocation2 + $0x268] sm:$0xff]
    %v615 = vld [vmem:[#allocation2 + $0x270] sm:$0xff]
    %v616 = vld [vmem:[#allocation2 + $0x278] sm:$0xff]
    %v617 = vld [vmem:[#allocation2 + $0x280] sm:$0xff]
    %v618 = vld [vmem:[#allocation2 + $0x288] sm:$0xff]
    %v619 = vld [vmem:[#allocation2 + $0x290] sm:$0xff]
    %v620 = vld [vmem:[#allocation2 + $0x298] sm:$0xff]
    %v621 = vld [vmem:[#allocation2 + $0x2a0] sm:$0xff]
    %v622 = vld [vmem:[#allocation2 + $0x2a8] sm:$0xff]
    %v623 = vld [vmem:[#allocation2 + $0x2b0] sm:$0xff]
    %v624 = vld [vmem:[#allocation2 + $0x2b8] sm:$0xff]
    %v625 = vld [vmem:[#allocation2 + $0x2c0] sm:$0xff]
    %v626 = vld [vmem:[#allocation2 + $0x2c8] sm:$0xff]
    %v627 = vld [vmem:[#allocation2 + $0x2d0] sm:$0xff]
    %v628 = vld [vmem:[#allocation2 + $0x2d8] sm:$0xff]
    %v629 = vld [vmem:[#allocation2 + $0x2e0] sm:$0xff]
    %v630 = vld [vmem:[#allocation2 + $0x2e8] sm:$0xff]
    %v631 = vld [vmem:[#allocation2 + $0x2f0] sm:$0xff]
    %v632 = vld [vmem:[#allocation2 + $0x2f8] sm:$0xff]
    %v633 = vld [vmem:[#allocation2 + $0x300] sm:$0xff]
    %v634 = vld [vmem:[#allocation2 + $0x308] sm:$0xff]
    %v635 = vld [vmem:[#allocation2 + $0x310] sm:$0xff]
    %v636 = vld [vmem:[#allocation2 + $0x318] sm:$0xff]
    %v637 = vld [vmem:[#allocation2 + $0x320] sm:$0xff]
    %v638 = vld [vmem:[#allocation2 + $0x328] sm:$0xff]
    %v639 = vld [vmem:[#allocation2 + $0x330] sm:$0xff]
    %v640 = vld [vmem:[#allocation2 + $0x338] sm:$0xff]
    %v641 = vld [vmem:[#allocation2 + $0x340] sm:$0xff]
    %v642 = vld [vmem:[#allocation2 + $0x348] sm:$0xff]
    %v643 = vld [vmem:[#allocation2 + $0x350] sm:$0xff]
    %v644 = vld [vmem:[#allocation2 + $0x358] sm:$0xff]
    %v645 = vld [vmem:[#allocation2 + $0x360] sm:$0xff]
    %v646 = vld [vmem:[#allocation2 + $0x368] sm:$0xff]
    %v647 = vld [vmem:[#allocation2 + $0x370] sm:$0xff]
    %v648 = vld [vmem:[#allocation2 + $0x378] sm:$0xff]
    %v649 = vld [vmem:[#allocation2 + $0x380] sm:$0xff]
    %v650 = vld [vmem:[#allocation2 + $0x388] sm:$0xff]
    %v651 = vld [vmem:[#allocation2 + $0x390] sm:$0xff]
    %v652 = vld [vmem:[#allocation2 + $0x398] sm:$0xff]
    %v653 = vld [vmem:[#allocation2 + $0x3a0] sm:$0xff]
    %v654 = vld [vmem:[#allocation2 + $0x3a8] sm:$0xff]
    %v655 = vld [vmem:[#allocation2 + $0x3b0] sm:$0xff]
    %v656 = vld [vmem:[#allocation2 + $0x3b8] sm:$0xff]
    %v657 = vld [vmem:[#allocation2 + $0x3c0] sm:$0xff]
    %v658 = vld [vmem:[#allocation2 + $0x3c8] sm:$0xff]
    %v659 = vld [vmem:[#allocation2 + $0x3d0] sm:$0xff]
    %v660 = vld [vmem:[#allocation2 + $0x3d8] sm:$0xff]
    %v661 = vld [vmem:[#allocation2 + $0x3e0] sm:$0xff]
    %v662 = vld [vmem:[#allocation2 + $0x3e8] sm:$0xff]
    %v663 = vld [vmem:[#allocation2 + $0x3f0] sm:$0xff]
    %v664 = vld [vmem:[#allocation2 + $0x3f8] sm:$0xff]
    %v665 = vld [vmem:[#allocation2 + $0x400] sm:$0xff]
    %v666 = vld [vmem:[#allocation2 + $0x408] sm:$0xff]
    %v667 = vld [vmem:[#allocation2 + $0x410] sm:$0xff]
    %v668 = vld [vmem:[#allocation2 + $0x418] sm:$0xff]
    %v669 = vld [vmem:[#allocation2 + $0x420] sm:$0xff]
    %v670 = vld [vmem:[#allocation2 + $0x428] sm:$0xff]
    %v671 = vld [vmem:[#allocation2 + $0x430] sm:$0xff]
    %v672 = vld [vmem:[#allocation2 + $0x438] sm:$0xff]
    %v673 = vld [vmem:[#allocation2 + $0x440] sm:$0xff]
    %v674 = vld [vmem:[#allocation2 + $0x448] sm:$0xff]
    %v675 = vld [vmem:[#allocation2 + $0x450] sm:$0xff]
    %v676 = vld [vmem:[#allocation2 + $0x458] sm:$0xff]
    %v677 = vld [vmem:[#allocation2 + $0x460] sm:$0xff]
    %v678 = vld [vmem:[#allocation2 + $0x468] sm:$0xff]
    %v679 = vld [vmem:[#allocation2 + $0x470] sm:$0xff]
    %v680 = vld [vmem:[#allocation2 + $0x478] sm:$0xff]
    %v681 = vld [vmem:[#allocation2 + $0x480] sm:$0xff]
    %v682 = vld [vmem:[#allocation2 + $0x488] sm:$0xff]
    %v683 = vld [vmem:[#allocation2 + $0x490] sm:$0xff]
    %v684 = vld [vmem:[#allocation2 + $0x498] sm:$0xff]
    %v685 = vld [vmem:[#allocation2 + $0x4a0] sm:$0xff]
    %v686 = vld [vmem:[#allocation2 + $0x4a8] sm:$0xff]
    %v687 = vld [vmem:[#allocation2 + $0x4b0] sm:$0xff]
    %v688 = vld [vmem:[#allocation2 + $0x4b8] sm:$0xff]
    %v689 = vld [vmem:[#allocation2 + $0x4c0] sm:$0xff]
    %v690 = vld [vmem:[#allocation2 + $0x4c8] sm:$0xff]
    %v691 = vld [vmem:[#allocation2 + $0x4d0] sm:$0xff]
    %v692 = vld [vmem:[#allocation2 + $0x4d8] sm:$0xff]
    %v693 = vld [vmem:[#allocation2 + $0x4e0] sm:$0xff]
    %v694 = vld [vmem:[#allocation2 + $0x4e8] sm:$0xff]
    %v695 = vld [vmem:[#allocation2 + $0x4f0] sm:$0xff]
    %v696 = vld [vmem:[#allocation2 + $0x4f8] sm:$0xff]
    %v697 = vld [vmem:[#allocation2 + $0x500] sm:$0xff]
    %v698 = vld [vmem:[#allocation2 + $0x508] sm:$0xff]
    %v699 = vld [vmem:[#allocation2 + $0x510] sm:$0xff]
    %v700 = vld [vmem:[#allocation2 + $0x518] sm:$0xff]
    %v701 = vld [vmem:[#allocation2 + $0x520] sm:$0xff]
    %v702 = vld [vmem:[#allocation2 + $0x528] sm:$0xff]
    %v703 = vld [vmem:[#allocation2 + $0x530] sm:$0xff]
    %v704 = vld [vmem:[#allocation2 + $0x538] sm:$0xff]
    %v705 = vld [vmem:[#allocation2 + $0x540] sm:$0xff]
    %v706 = vld [vmem:[#allocation2 + $0x548] sm:$0xff]
    %v707 = vld [vmem:[#allocation2 + $0x550] sm:$0xff]
    %v708 = vld [vmem:[#allocation2 + $0x558] sm:$0xff]
    %v709 = vld [vmem:[#allocation2 + $0x560] sm:$0xff]
    %v710 = vld [vmem:[#allocation2 + $0x568] sm:$0xff]
    %v711 = vld [vmem:[#allocation2 + $0x570] sm:$0xff]
    %v712 = vld [vmem:[#allocation2 + $0x578] sm:$0xff]
    %v713 = vld [vmem:[#allocation2 + $0x580] sm:$0xff]
    %v714 = vld [vmem:[#allocation2 + $0x588] sm:$0xff]
    %v715 = vld [vmem:[#allocation2 + $0x590] sm:$0xff]
    %v716 = vld [vmem:[#allocation2 + $0x598] sm:$0xff]
    %v717 = vld [vmem:[#allocation2 + $0x5a0] sm:$0xff]
    %v718 = vld [vmem:[#allocation2 + $0x5a8] sm:$0xff]
    %v719 = vld [vmem:[#allocation2 + $0x5b0] sm:$0xff]
    %v720 = vld [vmem:[#allocation2 + $0x5b8] sm:$0xff]
    %v721 = vld [vmem:[#allocation2 + $0x5c0] sm:$0xff]
    %v722 = vld [vmem:[#allocation2 + $0x5c8] sm:$0xff]
    %v723 = vld [vmem:[#allocation2 + $0x5d0] sm:$0xff]
    %v724 = vld [vmem:[#allocation2 + $0x5d8] sm:$0xff]
    %v725 = vld [vmem:[#allocation2 + $0x5e0] sm:$0xff]
    %v726 = vld [vmem:[#allocation2 + $0x5e8] sm:$0xff]
    %v727 = vld [vmem:[#allocation2 + $0x5f0] sm:$0xff]
    %v728 = vld [vmem:[#allocation2 + $0x5f8] sm:$0xff]
    %v729 = vld [vmem:[#allocation2 + $0x600] sm:$0xff]
    %v730 = vld [vmem:[#allocation2 + $0x608] sm:$0xff]
    %v731 = vld [vmem:[#allocation2 + $0x610] sm:$0xff]
    %v732 = vld [vmem:[#allocation2 + $0x618] sm:$0xff]
    %v733 = vld [vmem:[#allocation2 + $0x620] sm:$0xff]
    %v734 = vld [vmem:[#allocation2 + $0x628] sm:$0xff]
    %v735 = vld [vmem:[#allocation2 + $0x630] sm:$0xff]
    %v736 = vld [vmem:[#allocation2 + $0x638] sm:$0xff]
    %v737 = vld [vmem:[#allocation2 + $0x640] sm:$0xff]
    %v738 = vld [vmem:[#allocation2 + $0x648] sm:$0xff]
    %v739 = vld [vmem:[#allocation2 + $0x650] sm:$0xff]
    %v740 = vld [vmem:[#allocation2 + $0x658] sm:$0xff]
    %v741 = vld [vmem:[#allocation2 + $0x660] sm:$0xff]
    %v742 = vld [vmem:[#allocation2 + $0x668] sm:$0xff]
    %v743 = vld [vmem:[#allocation2 + $0x670] sm:$0xff]
    %v744 = vld [vmem:[#allocation2 + $0x678] sm:$0xff]
    %v745 = vld [vmem:[#allocation2 + $0x680] sm:$0xff]
    %v746 = vld [vmem:[#allocation2 + $0x688] sm:$0xff]
    %v747 = vld [vmem:[#allocation2 + $0x690] sm:$0xff]
    %v748 = vld [vmem:[#allocation2 + $0x698] sm:$0xff]
    %v749 = vld [vmem:[#allocation2 + $0x6a0] sm:$0xff]
    %v750 = vld [vmem:[#allocation2 + $0x6a8] sm:$0xff]
    %v751 = vld [vmem:[#allocation2 + $0x6b0] sm:$0xff]
    %v752 = vld [vmem:[#allocation2 + $0x6b8] sm:$0xff]
    %v753 = vld [vmem:[#allocation2 + $0x6c0] sm:$0xff]
    %v754 = vld [vmem:[#allocation2 + $0x6c8] sm:$0xff]
    %v755 = vld [vmem:[#allocation2 + $0x6d0] sm:$0xff]
    %v756 = vld [vmem:[#allocation2 + $0x6d8] sm:$0xff]
    %v757 = vld [vmem:[#allocation2 + $0x6e0] sm:$0xff]
    %v758 = vld [vmem:[#allocation2 + $0x6e8] sm:$0xff]
    %v759 = vld [vmem:[#allocation2 + $0x6f0] sm:$0xff]
    %v760 = vld [vmem:[#allocation2 + $0x6f8] sm:$0xff]
    %v762 = vlaneseq
    %v763 = vshrl.u32 %v762, 7
    %v764 = vsub.s32 0, %v763
    %v765 = vrot.slane %v37, %v764
    %v766 = vlaneseq
    %v767 = vshrl.u32 %v766, 7
    %v768 = vsub.s32 1, %v767
    %v769 = vrot.slane %v37, %v768
    %v770 = vlaneseq
    %v771 = vshrl.u32 %v770, 7
    %v772 = vsub.s32 2, %v771
    %v773 = vrot.slane %v37, %v772
    %v774 = vlaneseq
    %v775 = vshrl.u32 %v774, 7
    %v776 = vsub.s32 3, %v775
    %v777 = vrot.slane %v37, %v776
    %v1006 = vunpack.c.l.b16 %v537
    %v1007 = vunpack.c.h.b16 %v537
    %v1008 = vunpack.c.l.b16 %v538
    %v1009 = vunpack.c.h.b16 %v538
    %v1010 = vunpack.c.l.b16 %v539
    %v1011 = vunpack.c.h.b16 %v539
    %v1012 = vunpack.c.l.b16 %v540
    %v1013 = vunpack.c.h.b16 %v540
    %v1014 = vunpack.c.l.b16 %v541
    %v1015 = vunpack.c.h.b16 %v541
    %v1016 = vunpack.c.l.b16 %v542
    %v1017 = vunpack.c.h.b16 %v542
    %v1018 = vunpack.c.l.b16 %v543
    %v1019 = vunpack.c.h.b16 %v543
    %v1020 = vunpack.c.l.b16 %v544
    %v1021 = vunpack.c.h.b16 %v544
    %v1022 = vunpack.c.l.b16 %v545
    %v1023 = vunpack.c.h.b16 %v545
    %v1024 = vunpack.c.l.b16 %v546
    %v1025 = vunpack.c.h.b16 %v546
    %v1026 = vunpack.c.l.b16 %v547
    %v1027 = vunpack.c.h.b16 %v547
    %v1028 = vunpack.c.l.b16 %v548
    %v1029 = vunpack.c.h.b16 %v548
    %v1030 = vunpack.c.l.b16 %v549
    %v1031 = vunpack.c.h.b16 %v549
    %v1032 = vunpack.c.l.b16 %v550
    %v1033 = vunpack.c.h.b16 %v550
    %v1034 = vunpack.c.l.b16 %v551
    %v1035 = vunpack.c.h.b16 %v551
    %v1036 = vunpack.c.l.b16 %v552
    %v1037 = vunpack.c.h.b16 %v552
    %v1038 = vunpack.c.l.b16 %v553
    %v1039 = vunpack.c.h.b16 %v553
    %v1040 = vunpack.c.l.b16 %v554
    %v1041 = vunpack.c.h.b16 %v554
    %v1042 = vunpack.c.l.b16 %v555
    %v1043 = vunpack.c.h.b16 %v555
    %v1044 = vunpack.c.l.b16 %v556
    %v1045 = vunpack.c.h.b16 %v556
    %v1046 = vunpack.c.l.b16 %v557
    %v1047 = vunpack.c.h.b16 %v557
    %v1048 = vunpack.c.l.b16 %v558
    %v1049 = vunpack.c.h.b16 %v558
    %v1050 = vunpack.c.l.b16 %v559
    %v1051 = vunpack.c.h.b16 %v559
    %v1052 = vunpack.c.l.b16 %v560
    %v1053 = vunpack.c.h.b16 %v560
    %v1054 = vunpack.c.l.b16 %v561
    %v1055 = vunpack.c.h.b16 %v561
    %v1056 = vunpack.c.l.b16 %v562
    %v1057 = vunpack.c.h.b16 %v562
    %v1058 = vunpack.c.l.b16 %v563
    %v1059 = vunpack.c.h.b16 %v563
    %v1060 = vunpack.c.l.b16 %v564
    %v1061 = vunpack.c.h.b16 %v564
    %v1062 = vunpack.c.l.b16 %v565
    %v1063 = vunpack.c.h.b16 %v565
    %v1064 = vunpack.c.l.b16 %v566
    %v1065 = vunpack.c.h.b16 %v566
    %v1066 = vunpack.c.l.b16 %v567
    %v1067 = vunpack.c.h.b16 %v567
    %v1068 = vunpack.c.l.b16 %v568
    %v1069 = vunpack.c.h.b16 %v568
    %v1070 = vunpack.c.l.b16 %v569
    %v1071 = vunpack.c.h.b16 %v569
    %v1072 = vunpack.c.l.b16 %v570
    %v1073 = vunpack.c.h.b16 %v570
    %v1074 = vunpack.c.l.b16 %v571
    %v1075 = vunpack.c.h.b16 %v571
    %v1076 = vunpack.c.l.b16 %v572
    %v1077 = vunpack.c.h.b16 %v572
    %v1078 = vunpack.c.l.b16 %v573
    %v1079 = vunpack.c.h.b16 %v573
    %v1080 = vunpack.c.l.b16 %v574
    %v1081 = vunpack.c.h.b16 %v574
    %v1082 = vunpack.c.l.b16 %v575
    %v1083 = vunpack.c.h.b16 %v575
    %v1084 = vunpack.c.l.b16 %v576
    %v1085 = vunpack.c.h.b16 %v576
    %v1086 = vunpack.c.l.b16 %v577
    %v1087 = vunpack.c.h.b16 %v577
    %v1088 = vunpack.c.l.b16 %v578
    %v1089 = vunpack.c.h.b16 %v578
    %v1090 = vunpack.c.l.b16 %v579
    %v1091 = vunpack.c.h.b16 %v579
    %v1092 = vunpack.c.l.b16 %v580
    %v1093 = vunpack.c.h.b16 %v580
    %v1094 = vunpack.c.l.b16 %v581
    %v1095 = vunpack.c.h.b16 %v581
    %v1096 = vunpack.c.l.b16 %v582
    %v1097 = vunpack.c.h.b16 %v582
    %v1098 = vunpack.c.l.b16 %v583
    %v1099 = vunpack.c.h.b16 %v583
    %v1100 = vunpack.c.l.b16 %v584
    %v1101 = vunpack.c.h.b16 %v584
    %v1102 = vunpack.c.l.b16 %v585
    %v1103 = vunpack.c.h.b16 %v585
    %v1104 = vunpack.c.l.b16 %v586
    %v1105 = vunpack.c.h.b16 %v586
    %v1106 = vunpack.c.l.b16 %v587
    %v1107 = vunpack.c.h.b16 %v587
    %v1108 = vunpack.c.l.b16 %v588
    %v1109 = vunpack.c.h.b16 %v588
    %v1110 = vunpack.c.l.b16 %v589
    %v1111 = vunpack.c.h.b16 %v589
    %v1112 = vunpack.c.l.b16 %v590
    %v1113 = vunpack.c.h.b16 %v590
    %v1114 = vunpack.c.l.b16 %v591
    %v1115 = vunpack.c.h.b16 %v591
    %v1116 = vunpack.c.l.b16 %v592
    %v1117 = vunpack.c.h.b16 %v592
    %v1118 = vunpack.c.l.b16 %v593
    %v1119 = vunpack.c.h.b16 %v593
    %v1120 = vunpack.c.l.b16 %v594
    %v1121 = vunpack.c.h.b16 %v594
    %v1122 = vunpack.c.l.b16 %v595
    %v1123 = vunpack.c.h.b16 %v595
    %v1124 = vunpack.c.l.b16 %v596
    %v1125 = vunpack.c.h.b16 %v596
    %v1126 = vunpack.c.l.b16 %v597
    %v1127 = vunpack.c.h.b16 %v597
    %v1128 = vunpack.c.l.b16 %v598
    %v1129 = vunpack.c.h.b16 %v598
    %v1130 = vunpack.c.l.b16 %v599
    %v1131 = vunpack.c.h.b16 %v599
    %v1132 = vunpack.c.l.b16 %v600
    %v1133 = vunpack.c.h.b16 %v600
    %v1134 = vunpack.c.l.b16 %v601
    %v1135 = vunpack.c.h.b16 %v601
    %v1136 = vunpack.c.l.b16 %v602
    %v1137 = vunpack.c.h.b16 %v602
    %v1138 = vunpack.c.l.b16 %v603
    %v1139 = vunpack.c.h.b16 %v603
    %v1140 = vunpack.c.l.b16 %v604
    %v1141 = vunpack.c.h.b16 %v604
    %v1142 = vunpack.c.l.b16 %v605
    %v1143 = vunpack.c.h.b16 %v605
    %v1144 = vunpack.c.l.b16 %v606
    %v1145 = vunpack.c.h.b16 %v606
    %v1146 = vunpack.c.l.b16 %v607
    %v1147 = vunpack.c.h.b16 %v607
    %v1148 = vunpack.c.l.b16 %v608
    %v1149 = vunpack.c.h.b16 %v608
    %v1150 = vunpack.c.l.b16 %v609
    %v1151 = vunpack.c.h.b16 %v609
    %v1152 = vunpack.c.l.b16 %v610
    %v1153 = vunpack.c.h.b16 %v610
    %v1154 = vunpack.c.l.b16 %v611
    %v1155 = vunpack.c.h.b16 %v611
    %v1156 = vunpack.c.l.b16 %v612
    %v1157 = vunpack.c.h.b16 %v612
    %v1158 = vunpack.c.l.b16 %v613
    %v1159 = vunpack.c.h.b16 %v613
    %v1160 = vunpack.c.l.b16 %v614
    %v1161 = vunpack.c.h.b16 %v614
    %v1162 = vunpack.c.l.b16 %v615
    %v1163 = vunpack.c.h.b16 %v615
    %v1164 = vunpack.c.l.b16 %v616
    %v1165 = vunpack.c.h.b16 %v616
    %v1166 = vunpack.c.l.b16 %v617
    %v1167 = vunpack.c.h.b16 %v617
    %v1168 = vunpack.c.l.b16 %v618
    %v1169 = vunpack.c.h.b16 %v618
    %v1170 = vunpack.c.l.b16 %v619
    %v1171 = vunpack.c.h.b16 %v619
    %v1172 = vunpack.c.l.b16 %v620
    %v1173 = vunpack.c.h.b16 %v620
    %v1174 = vunpack.c.l.b16 %v621
    %v1175 = vunpack.c.h.b16 %v621
    %v1176 = vunpack.c.l.b16 %v622
    %v1177 = vunpack.c.h.b16 %v622
    %v1178 = vunpack.c.l.b16 %v623
    %v1179 = vunpack.c.h.b16 %v623
    %v1180 = vunpack.c.l.b16 %v624
    %v1181 = vunpack.c.h.b16 %v624
    %v1182 = vunpack.c.l.b16 %v625
    %v1183 = vunpack.c.h.b16 %v625
    %v1184 = vunpack.c.l.b16 %v626
    %v1185 = vunpack.c.h.b16 %v626
    %v1186 = vunpack.c.l.b16 %v627
    %v1187 = vunpack.c.h.b16 %v627
    %v1188 = vunpack.c.l.b16 %v628
    %v1189 = vunpack.c.h.b16 %v628
    %v1190 = vunpack.c.l.b16 %v629
    %v1191 = vunpack.c.h.b16 %v629
    %v1192 = vunpack.c.l.b16 %v630
    %v1193 = vunpack.c.h.b16 %v630
    %v1194 = vunpack.c.l.b16 %v631
    %v1195 = vunpack.c.h.b16 %v631
    %v1196 = vunpack.c.l.b16 %v632
    %v1197 = vunpack.c.h.b16 %v632
    %v1198 = vunpack.c.l.b16 %v633
    %v1199 = vunpack.c.h.b16 %v633
    %v1200 = vunpack.c.l.b16 %v634
    %v1201 = vunpack.c.h.b16 %v634
    %v1202 = vunpack.c.l.b16 %v635
    %v1203 = vunpack.c.h.b16 %v635
    %v1204 = vunpack.c.l.b16 %v636
    %v1205 = vunpack.c.h.b16 %v636
    %v1206 = vunpack.c.l.b16 %v637
    %v1207 = vunpack.c.h.b16 %v637
    %v1208 = vunpack.c.l.b16 %v638
    %v1209 = vunpack.c.h.b16 %v638
    %v1210 = vunpack.c.l.b16 %v639
    %v1211 = vunpack.c.h.b16 %v639
    %v1212 = vunpack.c.l.b16 %v640
    %v1213 = vunpack.c.h.b16 %v640
    %v1214 = vunpack.c.l.b16 %v641
    %v1215 = vunpack.c.h.b16 %v641
    %v1216 = vunpack.c.l.b16 %v642
    %v1217 = vunpack.c.h.b16 %v642
    %v1218 = vunpack.c.l.b16 %v643
    %v1219 = vunpack.c.h.b16 %v643
    %v1220 = vunpack.c.l.b16 %v644
    %v1221 = vunpack.c.h.b16 %v644
    %v1222 = vunpack.c.l.b16 %v645
    %v1223 = vunpack.c.h.b16 %v645
    %v1224 = vunpack.c.l.b16 %v646
    %v1225 = vunpack.c.h.b16 %v646
    %v1226 = vunpack.c.l.b16 %v647
    %v1227 = vunpack.c.h.b16 %v647
    %v1228 = vunpack.c.l.b16 %v648
    %v1229 = vunpack.c.h.b16 %v648
    %v1230 = vunpack.c.l.b16 %v649
    %v1231 = vunpack.c.h.b16 %v649
    %v1232 = vunpack.c.l.b16 %v650
    %v1233 = vunpack.c.h.b16 %v650
    %v1234 = vunpack.c.l.b16 %v651
    %v1235 = vunpack.c.h.b16 %v651
    %v1236 = vunpack.c.l.b16 %v652
    %v1237 = vunpack.c.h.b16 %v652
    %v1238 = vunpack.c.l.b16 %v653
    %v1239 = vunpack.c.h.b16 %v653
    %v1240 = vunpack.c.l.b16 %v654
    %v1241 = vunpack.c.h.b16 %v654
    %v1242 = vunpack.c.l.b16 %v655
    %v1243 = vunpack.c.h.b16 %v655
    %v1244 = vunpack.c.l.b16 %v656
    %v1245 = vunpack.c.h.b16 %v656
    %v1246 = vunpack.c.l.b16 %v657
    %v1247 = vunpack.c.h.b16 %v657
    %v1248 = vunpack.c.l.b16 %v658
    %v1249 = vunpack.c.h.b16 %v658
    %v1250 = vunpack.c.l.b16 %v659
    %v1251 = vunpack.c.h.b16 %v659
    %v1252 = vunpack.c.l.b16 %v660
    %v1253 = vunpack.c.h.b16 %v660
    %v1254 = vunpack.c.l.b16 %v661
    %v1255 = vunpack.c.h.b16 %v661
    %v1256 = vunpack.c.l.b16 %v662
    %v1257 = vunpack.c.h.b16 %v662
    %v1258 = vunpack.c.l.b16 %v663
    %v1259 = vunpack.c.h.b16 %v663
    %v1260 = vunpack.c.l.b16 %v664
    %v1261 = vunpack.c.h.b16 %v664
    %v1262 = vunpack.c.l.b16 %v665
    %v1263 = vunpack.c.h.b16 %v665
    %v1264 = vunpack.c.l.b16 %v666
    %v1265 = vunpack.c.h.b16 %v666
    %v1266 = vunpack.c.l.b16 %v667
    %v1267 = vunpack.c.h.b16 %v667
    %v1268 = vunpack.c.l.b16 %v668
    %v1269 = vunpack.c.h.b16 %v668
    %v1270 = vunpack.c.l.b16 %v669
    %v1271 = vunpack.c.h.b16 %v669
    %v1272 = vunpack.c.l.b16 %v670
    %v1273 = vunpack.c.h.b16 %v670
    %v1274 = vunpack.c.l.b16 %v671
    %v1275 = vunpack.c.h.b16 %v671
    %v1276 = vunpack.c.l.b16 %v672
    %v1277 = vunpack.c.h.b16 %v672
    %v1278 = vunpack.c.l.b16 %v673
    %v1279 = vunpack.c.h.b16 %v673
    %v1280 = vunpack.c.l.b16 %v674
    %v1281 = vunpack.c.h.b16 %v674
    %v1282 = vunpack.c.l.b16 %v675
    %v1283 = vunpack.c.h.b16 %v675
    %v1284 = vunpack.c.l.b16 %v676
    %v1285 = vunpack.c.h.b16 %v676
    %v1286 = vunpack.c.l.b16 %v677
    %v1287 = vunpack.c.h.b16 %v677
    %v1288 = vunpack.c.l.b16 %v678
    %v1289 = vunpack.c.h.b16 %v678
    %v1290 = vunpack.c.l.b16 %v679
    %v1291 = vunpack.c.h.b16 %v679
    %v1292 = vunpack.c.l.b16 %v680
    %v1293 = vunpack.c.h.b16 %v680
    %v1294 = vunpack.c.l.b16 %v681
    %v1295 = vunpack.c.h.b16 %v681
    %v1296 = vunpack.c.l.b16 %v682
    %v1297 = vunpack.c.h.b16 %v682
    %v1298 = vunpack.c.l.b16 %v683
    %v1299 = vunpack.c.h.b16 %v683
    %v1300 = vunpack.c.l.b16 %v684
    %v1301 = vunpack.c.h.b16 %v684
    %v1302 = vunpack.c.l.b16 %v685
    %v1303 = vunpack.c.h.b16 %v685
    %v1304 = vunpack.c.l.b16 %v686
    %v1305 = vunpack.c.h.b16 %v686
    %v1306 = vunpack.c.l.b16 %v687
    %v1307 = vunpack.c.h.b16 %v687
    %v1308 = vunpack.c.l.b16 %v688
    %v1309 = vunpack.c.h.b16 %v688
    %v1310 = vunpack.c.l.b16 %v689
    %v1311 = vunpack.c.h.b16 %v689
    %v1312 = vunpack.c.l.b16 %v690
    %v1313 = vunpack.c.h.b16 %v690
    %v1314 = vunpack.c.l.b16 %v691
    %v1315 = vunpack.c.h.b16 %v691
    %v1316 = vunpack.c.l.b16 %v692
    %v1317 = vunpack.c.h.b16 %v692
    %v1318 = vunpack.c.l.b16 %v693
    %v1319 = vunpack.c.h.b16 %v693
    %v1320 = vunpack.c.l.b16 %v694
    %v1321 = vunpack.c.h.b16 %v694
    %v1322 = vunpack.c.l.b16 %v695
    %v1323 = vunpack.c.h.b16 %v695
    %v1324 = vunpack.c.l.b16 %v696
    %v1325 = vunpack.c.h.b16 %v696
    %v1326 = vunpack.c.l.b16 %v697
    %v1327 = vunpack.c.h.b16 %v697
    %v1328 = vunpack.c.l.b16 %v698
    %v1329 = vunpack.c.h.b16 %v698
    %v1330 = vunpack.c.l.b16 %v699
    %v1331 = vunpack.c.h.b16 %v699
    %v1332 = vunpack.c.l.b16 %v700
    %v1333 = vunpack.c.h.b16 %v700
    %v1334 = vunpack.c.l.b16 %v701
    %v1335 = vunpack.c.h.b16 %v701
    %v1336 = vunpack.c.l.b16 %v702
    %v1337 = vunpack.c.h.b16 %v702
    %v1338 = vunpack.c.l.b16 %v703
    %v1339 = vunpack.c.h.b16 %v703
    %v1340 = vunpack.c.l.b16 %v704
    %v1341 = vunpack.c.h.b16 %v704
    %v1342 = vunpack.c.l.b16 %v705
    %v1343 = vunpack.c.h.b16 %v705
    %v1344 = vunpack.c.l.b16 %v706
    %v1345 = vunpack.c.h.b16 %v706
    %v1346 = vunpack.c.l.b16 %v707
    %v1347 = vunpack.c.h.b16 %v707
    %v1348 = vunpack.c.l.b16 %v708
    %v1349 = vunpack.c.h.b16 %v708
    %v1350 = vunpack.c.l.b16 %v709
    %v1351 = vunpack.c.h.b16 %v709
    %v1352 = vunpack.c.l.b16 %v710
    %v1353 = vunpack.c.h.b16 %v710
    %v1354 = vunpack.c.l.b16 %v711
    %v1355 = vunpack.c.h.b16 %v711
    %v1356 = vunpack.c.l.b16 %v712
    %v1357 = vunpack.c.h.b16 %v712
    %v1358 = vunpack.c.l.b16 %v713
    %v1359 = vunpack.c.h.b16 %v713
    %v1360 = vunpack.c.l.b16 %v714
    %v1361 = vunpack.c.h.b16 %v714
    %v1362 = vunpack.c.l.b16 %v715
    %v1363 = vunpack.c.h.b16 %v715
    %v1364 = vunpack.c.l.b16 %v716
    %v1365 = vunpack.c.h.b16 %v716
    %v1366 = vunpack.c.l.b16 %v717
    %v1367 = vunpack.c.h.b16 %v717
    %v1368 = vunpack.c.l.b16 %v718
    %v1369 = vunpack.c.h.b16 %v718
    %v1370 = vunpack.c.l.b16 %v719
    %v1371 = vunpack.c.h.b16 %v719
    %v1372 = vunpack.c.l.b16 %v720
    %v1373 = vunpack.c.h.b16 %v720
    %v1374 = vunpack.c.l.b16 %v721
    %v1375 = vunpack.c.h.b16 %v721
    %v1376 = vunpack.c.l.b16 %v722
    %v1377 = vunpack.c.h.b16 %v722
    %v1378 = vunpack.c.l.b16 %v723
    %v1379 = vunpack.c.h.b16 %v723
    %v1380 = vunpack.c.l.b16 %v724
    %v1381 = vunpack.c.h.b16 %v724
    %v1382 = vunpack.c.l.b16 %v725
    %v1383 = vunpack.c.h.b16 %v725
    %v1384 = vunpack.c.l.b16 %v726
    %v1385 = vunpack.c.h.b16 %v726
    %v1386 = vunpack.c.l.b16 %v727
    %v1387 = vunpack.c.h.b16 %v727
    %v1388 = vunpack.c.l.b16 %v728
    %v1389 = vunpack.c.h.b16 %v728
    %v1390 = vunpack.c.l.b16 %v729
    %v1391 = vunpack.c.h.b16 %v729
    %v1392 = vunpack.c.l.b16 %v730
    %v1393 = vunpack.c.h.b16 %v730
    %v1394 = vunpack.c.l.b16 %v731
    %v1395 = vunpack.c.h.b16 %v731
    %v1396 = vunpack.c.l.b16 %v732
    %v1397 = vunpack.c.h.b16 %v732
    %v1398 = vunpack.c.l.b16 %v733
    %v1399 = vunpack.c.h.b16 %v733
    %v1400 = vunpack.c.l.b16 %v734
    %v1401 = vunpack.c.h.b16 %v734
    %v1402 = vunpack.c.l.b16 %v735
    %v1403 = vunpack.c.h.b16 %v735
    %v1404 = vunpack.c.l.b16 %v736
    %v1405 = vunpack.c.h.b16 %v736
    %v1406 = vunpack.c.l.b16 %v737
    %v1407 = vunpack.c.h.b16 %v737
    %v1408 = vunpack.c.l.b16 %v738
    %v1409 = vunpack.c.h.b16 %v738
    %v1410 = vunpack.c.l.b16 %v739
    %v1411 = vunpack.c.h.b16 %v739
    %v1412 = vunpack.c.l.b16 %v740
    %v1413 = vunpack.c.h.b16 %v740
    %v1414 = vunpack.c.l.b16 %v741
    %v1415 = vunpack.c.h.b16 %v741
    %v1416 = vunpack.c.l.b16 %v742
    %v1417 = vunpack.c.h.b16 %v742
    %v1418 = vunpack.c.l.b16 %v743
    %v1419 = vunpack.c.h.b16 %v743
    %v1420 = vunpack.c.l.b16 %v744
    %v1421 = vunpack.c.h.b16 %v744
    %v1422 = vunpack.c.l.b16 %v745
    %v1423 = vunpack.c.h.b16 %v745
    %v1424 = vunpack.c.l.b16 %v746
    %v1425 = vunpack.c.h.b16 %v746
    %v1426 = vunpack.c.l.b16 %v747
    %v1427 = vunpack.c.h.b16 %v747
    %v1428 = vunpack.c.l.b16 %v748
    %v1429 = vunpack.c.h.b16 %v748
    %v1430 = vunpack.c.l.b16 %v749
    %v1431 = vunpack.c.h.b16 %v749
    %v1432 = vunpack.c.l.b16 %v750
    %v1433 = vunpack.c.h.b16 %v750
    %v1434 = vunpack.c.l.b16 %v751
    %v1435 = vunpack.c.h.b16 %v751
    %v1436 = vunpack.c.l.b16 %v752
    %v1437 = vunpack.c.h.b16 %v752
    %v1438 = vunpack.c.l.b16 %v753
    %v1439 = vunpack.c.h.b16 %v753
    %v1440 = vunpack.c.l.b16 %v754
    %v1441 = vunpack.c.h.b16 %v754
    %v1442 = vunpack.c.l.b16 %v755
    %v1443 = vunpack.c.h.b16 %v755
    %v1444 = vunpack.c.l.b16 %v756
    %v1445 = vunpack.c.h.b16 %v756
    %v1446 = vunpack.c.l.b16 %v757
    %v1447 = vunpack.c.h.b16 %v757
    %v1448 = vunpack.c.l.b16 %v758
    %v1449 = vunpack.c.h.b16 %v758
    %v1450 = vunpack.c.l.b16 %v759
    %v1451 = vunpack.c.h.b16 %v759
    %v1452 = vunpack.c.l.b16 %v760
    %v1453 = vunpack.c.h.b16 %v760
    %v1454 = vpack.c.b16 %v1010, %v1006
    %v1455 = vpack.c.b16 %v1011, %v1007
    %v1456 = vpack.c.b16 %v1012, %v1008
    %v1457 = vpack.c.b16 %v1013, %v1009
    %v1458 = vpack.c.b16 %v1018, %v1014
    %v1459 = vpack.c.b16 %v1019, %v1015
    %v1460 = vpack.c.b16 %v1020, %v1016
    %v1461 = vpack.c.b16 %v1021, %v1017
    %v1462 = vpack.c.b16 %v1026, %v1022
    %v1463 = vpack.c.b16 %v1027, %v1023
    %v1464 = vpack.c.b16 %v1028, %v1024
    %v1465 = vpack.c.b16 %v1029, %v1025
    %v1466 = vpack.c.b16 %v1034, %v1030
    %v1467 = vpack.c.b16 %v1035, %v1031
    %v1468 = vpack.c.b16 %v1036, %v1032
    %v1469 = vpack.c.b16 %v1037, %v1033
    %v1470 = vpack.c.b16 %v1042, %v1038
    %v1471 = vpack.c.b16 %v1043, %v1039
    %v1472 = vpack.c.b16 %v1044, %v1040
    %v1473 = vpack.c.b16 %v1045, %v1041
    %v1474 = vpack.c.b16 %v1050, %v1046
    %v1475 = vpack.c.b16 %v1051, %v1047
    %v1476 = vpack.c.b16 %v1052, %v1048
    %v1477 = vpack.c.b16 %v1053, %v1049
    %v1478 = vpack.c.b16 %v1058, %v1054
    %v1479 = vpack.c.b16 %v1059, %v1055
    %v1480 = vpack.c.b16 %v1060, %v1056
    %v1481 = vpack.c.b16 %v1061, %v1057
    %v1482 = vpack.c.b16 %v1066, %v1062
    %v1483 = vpack.c.b16 %v1067, %v1063
    %v1484 = vpack.c.b16 %v1068, %v1064
    %v1485 = vpack.c.b16 %v1069, %v1065
    %v1486 = vpack.c.b16 %v1074, %v1070
    %v1487 = vpack.c.b16 %v1075, %v1071
    %v1488 = vpack.c.b16 %v1076, %v1072
    %v1489 = vpack.c.b16 %v1077, %v1073
    %v1490 = vpack.c.b16 %v1082, %v1078
    %v1491 = vpack.c.b16 %v1083, %v1079
    %v1492 = vpack.c.b16 %v1084, %v1080
    %v1493 = vpack.c.b16 %v1085, %v1081
    %v1494 = vpack.c.b16 %v1090, %v1086
    %v1495 = vpack.c.b16 %v1091, %v1087
    %v1496 = vpack.c.b16 %v1092, %v1088
    %v1497 = vpack.c.b16 %v1093, %v1089
    %v1498 = vpack.c.b16 %v1098, %v1094
    %v1499 = vpack.c.b16 %v1099, %v1095
    %v1500 = vpack.c.b16 %v1100, %v1096
    %v1501 = vpack.c.b16 %v1101, %v1097
    %v1502 = vpack.c.b16 %v1106, %v1102
    %v1503 = vpack.c.b16 %v1107, %v1103
    %v1504 = vpack.c.b16 %v1108, %v1104
    %v1505 = vpack.c.b16 %v1109, %v1105
    %v1506 = vpack.c.b16 %v1114, %v1110
    %v1507 = vpack.c.b16 %v1115, %v1111
    %v1508 = vpack.c.b16 %v1116, %v1112
    %v1509 = vpack.c.b16 %v1117, %v1113
    %v1510 = vpack.c.b16 %v1122, %v1118
    %v1511 = vpack.c.b16 %v1123, %v1119
    %v1512 = vpack.c.b16 %v1124, %v1120
    %v1513 = vpack.c.b16 %v1125, %v1121
    %v1514 = vpack.c.b16 %v1130, %v1126
    %v1515 = vpack.c.b16 %v1131, %v1127
    %v1516 = vpack.c.b16 %v1132, %v1128
    %v1517 = vpack.c.b16 %v1133, %v1129
    %v1518 = vpack.c.b16 %v1138, %v1134
    %v1519 = vpack.c.b16 %v1139, %v1135
    %v1520 = vpack.c.b16 %v1140, %v1136
    %v1521 = vpack.c.b16 %v1141, %v1137
    %v1522 = vpack.c.b16 %v1146, %v1142
    %v1523 = vpack.c.b16 %v1147, %v1143
    %v1524 = vpack.c.b16 %v1148, %v1144
    %v1525 = vpack.c.b16 %v1149, %v1145
    %v1526 = vpack.c.b16 %v1154, %v1150
    %v1527 = vpack.c.b16 %v1155, %v1151
    %v1528 = vpack.c.b16 %v1156, %v1152
    %v1529 = vpack.c.b16 %v1157, %v1153
    %v1530 = vpack.c.b16 %v1162, %v1158
    %v1531 = vpack.c.b16 %v1163, %v1159
    %v1532 = vpack.c.b16 %v1164, %v1160
    %v1533 = vpack.c.b16 %v1165, %v1161
    %v1534 = vpack.c.b16 %v1170, %v1166
    %v1535 = vpack.c.b16 %v1171, %v1167
    %v1536 = vpack.c.b16 %v1172, %v1168
    %v1537 = vpack.c.b16 %v1173, %v1169
    %v1538 = vpack.c.b16 %v1178, %v1174
    %v1539 = vpack.c.b16 %v1179, %v1175
    %v1540 = vpack.c.b16 %v1180, %v1176
    %v1541 = vpack.c.b16 %v1181, %v1177
    %v1542 = vpack.c.b16 %v1186, %v1182
    %v1543 = vpack.c.b16 %v1187, %v1183
    %v1544 = vpack.c.b16 %v1188, %v1184
    %v1545 = vpack.c.b16 %v1189, %v1185
    %v1546 = vpack.c.b16 %v1194, %v1190
    %v1547 = vpack.c.b16 %v1195, %v1191
    %v1548 = vpack.c.b16 %v1196, %v1192
    %v1549 = vpack.c.b16 %v1197, %v1193
    %v1550 = vpack.c.b16 %v1202, %v1198
    %v1551 = vpack.c.b16 %v1203, %v1199
    %v1552 = vpack.c.b16 %v1204, %v1200
    %v1553 = vpack.c.b16 %v1205, %v1201
    %v1554 = vpack.c.b16 %v1210, %v1206
    %v1555 = vpack.c.b16 %v1211, %v1207
    %v1556 = vpack.c.b16 %v1212, %v1208
    %v1557 = vpack.c.b16 %v1213, %v1209
    %v1558 = vpack.c.b16 %v1218, %v1214
    %v1559 = vpack.c.b16 %v1219, %v1215
    %v1560 = vpack.c.b16 %v1220, %v1216
    %v1561 = vpack.c.b16 %v1221, %v1217
    %v1562 = vpack.c.b16 %v1226, %v1222
    %v1563 = vpack.c.b16 %v1227, %v1223
    %v1564 = vpack.c.b16 %v1228, %v1224
    %v1565 = vpack.c.b16 %v1229, %v1225
    %v1566 = vpack.c.b16 %v1234, %v1230
    %v1567 = vpack.c.b16 %v1235, %v1231
    %v1568 = vpack.c.b16 %v1236, %v1232
    %v1569 = vpack.c.b16 %v1237, %v1233
    %v1570 = vpack.c.b16 %v1242, %v1238
    %v1571 = vpack.c.b16 %v1243, %v1239
    %v1572 = vpack.c.b16 %v1244, %v1240
    %v1573 = vpack.c.b16 %v1245, %v1241
    %v1574 = vpack.c.b16 %v1250, %v1246
    %v1575 = vpack.c.b16 %v1251, %v1247
    %v1576 = vpack.c.b16 %v1252, %v1248
    %v1577 = vpack.c.b16 %v1253, %v1249
    %v1578 = vpack.c.b16 %v1258, %v1254
    %v1579 = vpack.c.b16 %v1259, %v1255
    %v1580 = vpack.c.b16 %v1260, %v1256
    %v1581 = vpack.c.b16 %v1261, %v1257
    %v1582 = vpack.c.b16 %v1266, %v1262
    %v1583 = vpack.c.b16 %v1267, %v1263
    %v1584 = vpack.c.b16 %v1268, %v1264
    %v1585 = vpack.c.b16 %v1269, %v1265
    %v1586 = vpack.c.b16 %v1274, %v1270
    %v1587 = vpack.c.b16 %v1275, %v1271
    %v1588 = vpack.c.b16 %v1276, %v1272
    %v1589 = vpack.c.b16 %v1277, %v1273
    %v1590 = vpack.c.b16 %v1282, %v1278
    %v1591 = vpack.c.b16 %v1283, %v1279
    %v1592 = vpack.c.b16 %v1284, %v1280
    %v1593 = vpack.c.b16 %v1285, %v1281
    %v1594 = vpack.c.b16 %v1290, %v1286
    %v1595 = vpack.c.b16 %v1291, %v1287
    %v1596 = vpack.c.b16 %v1292, %v1288
    %v1597 = vpack.c.b16 %v1293, %v1289
    %v1598 = vpack.c.b16 %v1298, %v1294
    %v1599 = vpack.c.b16 %v1299, %v1295
    %v1600 = vpack.c.b16 %v1300, %v1296
    %v1601 = vpack.c.b16 %v1301, %v1297
    %v1602 = vpack.c.b16 %v1306, %v1302
    %v1603 = vpack.c.b16 %v1307, %v1303
    %v1604 = vpack.c.b16 %v1308, %v1304
    %v1605 = vpack.c.b16 %v1309, %v1305
    %v1606 = vpack.c.b16 %v1314, %v1310
    %v1607 = vpack.c.b16 %v1315, %v1311
    %v1608 = vpack.c.b16 %v1316, %v1312
    %v1609 = vpack.c.b16 %v1317, %v1313
    %v1610 = vpack.c.b16 %v1322, %v1318
    %v1611 = vpack.c.b16 %v1323, %v1319
    %v1612 = vpack.c.b16 %v1324, %v1320
    %v1613 = vpack.c.b16 %v1325, %v1321
    %v1614 = vpack.c.b16 %v1330, %v1326
    %v1615 = vpack.c.b16 %v1331, %v1327
    %v1616 = vpack.c.b16 %v1332, %v1328
    %v1617 = vpack.c.b16 %v1333, %v1329
    %v1618 = vpack.c.b16 %v1338, %v1334
    %v1619 = vpack.c.b16 %v1339, %v1335
    %v1620 = vpack.c.b16 %v1340, %v1336
    %v1621 = vpack.c.b16 %v1341, %v1337
    %v1622 = vpack.c.b16 %v1346, %v1342
    %v1623 = vpack.c.b16 %v1347, %v1343
    %v1624 = vpack.c.b16 %v1348, %v1344
    %v1625 = vpack.c.b16 %v1349, %v1345
    %v1626 = vpack.c.b16 %v1354, %v1350
    %v1627 = vpack.c.b16 %v1355, %v1351
    %v1628 = vpack.c.b16 %v1356, %v1352
    %v1629 = vpack.c.b16 %v1357, %v1353
    %v1630 = vpack.c.b16 %v1362, %v1358
    %v1631 = vpack.c.b16 %v1363, %v1359
    %v1632 = vpack.c.b16 %v1364, %v1360
    %v1633 = vpack.c.b16 %v1365, %v1361
    %v1634 = vpack.c.b16 %v1370, %v1366
    %v1635 = vpack.c.b16 %v1371, %v1367
    %v1636 = vpack.c.b16 %v1372, %v1368
    %v1637 = vpack.c.b16 %v1373, %v1369
    %v1638 = vpack.c.b16 %v1378, %v1374
    %v1639 = vpack.c.b16 %v1379, %v1375
    %v1640 = vpack.c.b16 %v1380, %v1376
    %v1641 = vpack.c.b16 %v1381, %v1377
    %v1642 = vpack.c.b16 %v1386, %v1382
    %v1643 = vpack.c.b16 %v1387, %v1383
    %v1644 = vpack.c.b16 %v1388, %v1384
    %v1645 = vpack.c.b16 %v1389, %v1385
    %v1646 = vpack.c.b16 %v1394, %v1390
    %v1647 = vpack.c.b16 %v1395, %v1391
    %v1648 = vpack.c.b16 %v1396, %v1392
    %v1649 = vpack.c.b16 %v1397, %v1393
    %v1650 = vpack.c.b16 %v1402, %v1398
    %v1651 = vpack.c.b16 %v1403, %v1399
    %v1652 = vpack.c.b16 %v1404, %v1400
    %v1653 = vpack.c.b16 %v1405, %v1401
    %v1654 = vpack.c.b16 %v1410, %v1406
    %v1655 = vpack.c.b16 %v1411, %v1407
    %v1656 = vpack.c.b16 %v1412, %v1408
    %v1657 = vpack.c.b16 %v1413, %v1409
    %v1658 = vpack.c.b16 %v1418, %v1414
    %v1659 = vpack.c.b16 %v1419, %v1415
    %v1660 = vpack.c.b16 %v1420, %v1416
    %v1661 = vpack.c.b16 %v1421, %v1417
    %v1662 = vpack.c.b16 %v1426, %v1422
    %v1663 = vpack.c.b16 %v1427, %v1423
    %v1664 = vpack.c.b16 %v1428, %v1424
    %v1665 = vpack.c.b16 %v1429, %v1425
    %v1666 = vpack.c.b16 %v1434, %v1430
    %v1667 = vpack.c.b16 %v1435, %v1431
    %v1668 = vpack.c.b16 %v1436, %v1432
    %v1669 = vpack.c.b16 %v1437, %v1433
    %v1670 = vpack.c.b16 %v1442, %v1438
    %v1671 = vpack.c.b16 %v1443, %v1439
    %v1672 = vpack.c.b16 %v1444, %v1440
    %v1673 = vpack.c.b16 %v1445, %v1441
    %v1674 = vpack.c.b16 %v1450, %v1446
    %v1675 = vpack.c.b16 %v1451, %v1447
    %v1676 = vpack.c.b16 %v1452, %v1448
    %v1677 = vpack.c.b16 %v1453, %v1449
    %1902 = vmatprep.subr.bf16.mxu0 %v1455
    %1903 = vmatpush1.bf16.msra.mxu0 %v1454
    %1904 = vmatprep.subr.bf16.mxu0 %v1459
    %1905 = vmatpush1.bf16.msra.mxu0 %v1458
    %1906 = vmatprep.subr.bf16.mxu0 %v1463
    %1907 = vmatpush1.bf16.msra.mxu0 %v1462
    %1908 = vmatprep.subr.bf16.mxu0 %v1467
    %1909 = vmatpush1.bf16.msra.mxu0 %v1466
    %1910 = vmatprep.subr.bf16.mxu0 %v1471
    %1911 = vmatpush1.bf16.msra.mxu0 %v1470
    %1912 = vmatprep.subr.bf16.mxu0 %v1475
    %1913 = vmatpush1.bf16.msra.mxu0 %v1474
    %1914 = vmatprep.subr.bf16.mxu0 %v1479
    %1915 = vmatpush1.bf16.msra.mxu0 %v1478
    %1916 = vmatprep.subr.bf16.mxu0 %v1483
    %1917 = vmatpush1.bf16.msra.mxu0 %v1482
    %1918 = vmatprep.subr.bf16.mxu0 %v1487
    %1919 = vmatpush1.bf16.msra.mxu0 %v1486
    %1920 = vmatprep.subr.bf16.mxu0 %v1491
    %1921 = vmatpush1.bf16.msra.mxu0 %v1490
    %1922 = vmatprep.subr.bf16.mxu0 %v1495
    %1923 = vmatpush1.bf16.msra.mxu0 %v1494
    %1924 = vmatprep.subr.bf16.mxu0 %v1499
    %1925 = vmatpush1.bf16.msra.mxu0 %v1498
    %1926 = vmatprep.subr.bf16.mxu0 %v1503
    %1927 = vmatpush1.bf16.msra.mxu0 %v1502
    %1928 = vmatprep.subr.bf16.mxu0 %v1507
    %1929 = vmatpush1.bf16.msra.mxu0 %v1506
    %1930 = vmatprep.subr.bf16.mxu0 %v1511
    %1931 = vmatpush1.bf16.msra.mxu0 %v1510
    %1932 = vmatprep.subr.bf16.mxu0 %v1515
    %1933 = vmatpush1.bf16.msra.mxu0 %v1514
    %1934 = vmatprep.mubr.bf16.mxu0 %v531
    %1935 = vmatmul.mubr.bf16.gmra.mrb[0].mxu0 %v530
    %v1936 = vpop.f32.mrb[0].mxu0
    %v1937 = vadd.f32 %v765, %v1936
    %v1938 = vpop.f32.mrb[0].mxu0
    %v1939 = vadd.f32 %v769, %v1938
    %v1940 = vpop.f32.mrb[0].mxu0
    %v1941 = vpop.f32.mrb[0].mxu0
    %1942 = vdwg.mxu0
    %1943 = vmatprep.subr.bf16.mxu0 %v1519
    %1944 = vmatpush1.bf16.msra.mxu0 %v1518
    %1945 = vmatprep.subr.bf16.mxu0 %v1523
    %1946 = vmatpush1.bf16.msra.mxu0 %v1522
    %1947 = vmatprep.subr.bf16.mxu0 %v1527
    %1948 = vmatpush1.bf16.msra.mxu0 %v1526
    %1949 = vmatprep.subr.bf16.mxu0 %v1531
    %1950 = vmatpush1.bf16.msra.mxu0 %v1530
    %1951 = vmatprep.subr.bf16.mxu0 %v1535
    %1952 = vmatpush1.bf16.msra.mxu0 %v1534
    %1953 = vmatprep.subr.bf16.mxu0 %v1539
    %1954 = vmatpush1.bf16.msra.mxu0 %v1538
    %1955 = vmatprep.subr.bf16.mxu0 %v1543
    %1956 = vmatpush1.bf16.msra.mxu0 %v1542
    %1957 = vmatprep.subr.bf16.mxu0 %v1547
    %1958 = vmatpush1.bf16.msra.mxu0 %v1546
    %1959 = vmatprep.subr.bf16.mxu0 %v1551
    %1960 = vmatpush1.bf16.msra.mxu0 %v1550
    %1961 = vmatprep.subr.bf16.mxu0 %v1555
    %1962 = vmatpush1.bf16.msra.mxu0 %v1554
    %1963 = vmatprep.subr.bf16.mxu0 %v1559
    %1964 = vmatpush1.bf16.msra.mxu0 %v1558
    %1965 = vmatprep.subr.bf16.mxu0 %v1563
    %1966 = vmatpush1.bf16.msra.mxu0 %v1562
    %1967 = vmatprep.subr.bf16.mxu0 %v1567
    %1968 = vmatpush1.bf16.msra.mxu0 %v1566
    %1969 = vmatprep.subr.bf16.mxu0 %v1571
    %1970 = vmatpush1.bf16.msra.mxu0 %v1570
    %1971 = vmatprep.subr.bf16.mxu0 %v1575
    %1972 = vmatpush1.bf16.msra.mxu0 %v1574
    %1973 = vmatprep.subr.bf16.mxu0 %v1579
    %1974 = vmatpush1.bf16.msra.mxu0 %v1578
    %1975 = vmatprep.mubr.bf16.mxu0 %v533
    %1976 = vmatmul.mubr.bf16.gmra.mrb[0].mxu0 %v532
    %v1977 = vpop.f32.mrb[0].mxu0
    %v1978 = vadd.f32 %v1937, %v1977
    %v1979 = vpop.f32.mrb[0].mxu0
    %v1980 = vadd.f32 %v1939, %v1979
    %v1981 = vpop.f32.mrb[0].mxu0
    %v1982 = vpop.f32.mrb[0].mxu0
    %1983 = vdwg.mxu0
    %1984 = vmatprep.subr.bf16.mxu0 %v1583
    %1985 = vmatpush1.bf16.msra.mxu0 %v1582
    %1986 = vmatprep.subr.bf16.mxu0 %v1587
    %1987 = vmatpush1.bf16.msra.mxu0 %v1586
    %1988 = vmatprep.subr.bf16.mxu0 %v1591
    %1989 = vmatpush1.bf16.msra.mxu0 %v1590
    %1990 = vmatprep.subr.bf16.mxu0 %v1595
    %1991 = vmatpush1.bf16.msra.mxu0 %v1594
    %1992 = vmatprep.subr.bf16.mxu0 %v1599
    %1993 = vmatpush1.bf16.msra.mxu0 %v1598
    %1994 = vmatprep.subr.bf16.mxu0 %v1603
    %1995 = vmatpush1.bf16.msra.mxu0 %v1602
    %1996 = vmatprep.subr.bf16.mxu0 %v1607
    %1997 = vmatpush1.bf16.msra.mxu0 %v1606
    %1998 = vmatprep.subr.bf16.mxu0 %v1611
    %1999 = vmatpush1.bf16.msra.mxu0 %v1610
    %2000 = vmatprep.subr.bf16.mxu0 %v1615
    %2001 = vmatpush1.bf16.msra.mxu0 %v1614
    %2002 = vmatprep.subr.bf16.mxu0 %v1619
    %2003 = vmatpush1.bf16.msra.mxu0 %v1618
    %2004 = vmatprep.subr.bf16.mxu0 %v1623
    %2005 = vmatpush1.bf16.msra.mxu0 %v1622
    %2006 = vmatprep.subr.bf16.mxu0 %v1627
    %2007 = vmatpush1.bf16.msra.mxu0 %v1626
    %2008 = vmatprep.subr.bf16.mxu0 %v1631
    %2009 = vmatpush1.bf16.msra.mxu0 %v1630
    %2010 = vmatprep.subr.bf16.mxu0 %v1635
    %2011 = vmatpush1.bf16.msra.mxu0 %v1634
    %2012 = vmatprep.subr.bf16.mxu0 %v1639
    %2013 = vmatpush1.bf16.msra.mxu0 %v1638
    %2014 = vmatprep.subr.bf16.mxu0 %v1643
    %2015 = vmatpush1.bf16.msra.mxu0 %v1642
    %2016 = vmatprep.mubr.bf16.mxu0 %v535
    %2017 = vmatmul.mubr.bf16.gmra.mrb[0].mxu0 %v534
    %v2018 = vpop.f32.mrb[0].mxu0
    %v2019 = vadd.f32 %v1978, %v2018
    %v2020 = vpop.f32.mrb[0].mxu0
    %v2021 = vadd.f32 %v1980, %v2020
    %v2022 = vpop.f32.mrb[0].mxu0
    %v2023 = vpop.f32.mrb[0].mxu0
    %2024 = vdwg.mxu0
    %2025 = vmatprep.subr.bf16.mxu0 %v1647
    %2026 = vmatpush1.bf16.msra.mxu0 %v1646
    %2027 = vmatprep.subr.bf16.mxu0 %v1651
    %2028 = vmatpush1.bf16.msra.mxu0 %v1650
    %2029 = vmatprep.subr.bf16.mxu0 %v1655
    %2030 = vmatpush1.bf16.msra.mxu0 %v1654
    %2031 = vmatprep.subr.bf16.mxu0 %v1659
    %2032 = vmatpush1.bf16.msra.mxu0 %v1658
    %2033 = vmatprep.subr.bf16.mxu0 %v1663
    %2034 = vmatpush1.bf16.msra.mxu0 %v1662
    %2035 = vmatprep.subr.bf16.mxu0 %v1667
    %2036 = vmatpush1.bf16.msra.mxu0 %v1666
    %2037 = vmatprep.subr.bf16.mxu0 %v1671
    %2038 = vmatpush1.bf16.msra.mxu0 %v1670
    %2039 = vmatprep.subr.bf16.mxu0 %v1675
    %2040 = vmatpush1.bf16.msra.mxu0 %v1674
    %2041 = vmatprep.subr.bf16.mxu0 0
    %2042 = vmatpush1.bf16.msra.mxu0 0
    %2043 = vmatprep.subr.bf16.mxu0 0
    %2044 = vmatpush1.bf16.msra.mxu0 0
    %2045 = vmatprep.subr.bf16.mxu0 0
    %2046 = vmatpush1.bf16.msra.mxu0 0
    %2047 = vmatprep.subr.bf16.mxu0 0
    %2048 = vmatpush1.bf16.msra.mxu0 0
    %2049 = vmatprep.subr.bf16.mxu0 0
    %2050 = vmatpush1.bf16.msra.mxu0 0
    %2051 = vmatprep.subr.bf16.mxu0 0
    %2052 = vmatpush1.bf16.msra.mxu0 0
    %2053 = vmatprep.subr.bf16.mxu0 0
    %2054 = vmatpush1.bf16.msra.mxu0 0
    %2055 = vmatprep.subr.bf16.mxu0 0
    %2056 = vmatpush1.bf16.msra.mxu0 0
    %2057 = vmatprep.mubr.bf16.mxu0 0
    %2058 = vmatmul.mubr.bf16.gmra.mrb[0].mxu0 %v536
    %v2059 = vpop.f32.mrb[0].mxu0
    %v2060 = vadd.f32 %v2019, %v2059
    %v2061 = vpop.f32.mrb[0].mxu0
    %v2062 = vadd.f32 %v2021, %v2061
    %v2063 = vpop.f32.mrb[0].mxu0
    %v2064 = vpop.f32.mrb[0].mxu0
    %2065 = vdwg.mxu0
    %2066 = vmatprep.subr.bf16.mxu0 %v1457
    %2067 = vmatpush1.bf16.msra.mxu0 %v1456
    %2068 = vmatprep.subr.bf16.mxu0 %v1461
    %2069 = vmatpush1.bf16.msra.mxu0 %v1460
    %2070 = vmatprep.subr.bf16.mxu0 %v1465
    %2071 = vmatpush1.bf16.msra.mxu0 %v1464
    %2072 = vmatprep.subr.bf16.mxu0 %v1469
    %2073 = vmatpush1.bf16.msra.mxu0 %v1468
    %2074 = vmatprep.subr.bf16.mxu0 %v1473
    %2075 = vmatpush1.bf16.msra.mxu0 %v1472
    %2076 = vmatprep.subr.bf16.mxu0 %v1477
    %2077 = vmatpush1.bf16.msra.mxu0 %v1476
    %2078 = vmatprep.subr.bf16.mxu0 %v1481
    %2079 = vmatpush1.bf16.msra.mxu0 %v1480
    %2080 = vmatprep.subr.bf16.mxu0 %v1485
    %2081 = vmatpush1.bf16.msra.mxu0 %v1484
    %2082 = vmatprep.subr.bf16.mxu0 %v1489
    %2083 = vmatpush1.bf16.msra.mxu0 %v1488
    %2084 = vmatprep.subr.bf16.mxu0 %v1493
    %2085 = vmatpush1.bf16.msra.mxu0 %v1492
    %2086 = vmatprep.subr.bf16.mxu0 %v1497
    %2087 = vmatpush1.bf16.msra.mxu0 %v1496
    %2088 = vmatprep.subr.bf16.mxu0 %v1501
    %2089 = vmatpush1.bf16.msra.mxu0 %v1500
    %2090 = vmatprep.subr.bf16.mxu0 %v1505
    %2091 = vmatpush1.bf16.msra.mxu0 %v1504
    %2092 = vmatprep.subr.bf16.mxu0 %v1509
    %2093 = vmatpush1.bf16.msra.mxu0 %v1508
    %2094 = vmatprep.subr.bf16.mxu0 %v1513
    %2095 = vmatpush1.bf16.msra.mxu0 %v1512
    %2096 = vmatprep.subr.bf16.mxu0 %v1517
    %2097 = vmatpush1.bf16.msra.mxu0 %v1516
    %2098 = vmatprep.mubr.bf16.mxu0 %v531
    %2099 = vmatmul.mubr.bf16.gmra.mrb[0].mxu0 %v530
    %v2100 = vpop.f32.mrb[0].mxu0
    %v2101 = vadd.f32 %v773, %v2100
    %v2102 = vpop.f32.mrb[0].mxu0
    %v2103 = vadd.f32 %v777, %v2102
    %v2104 = vpop.f32.mrb[0].mxu0
    %v2105 = vpop.f32.mrb[0].mxu0
    %2106 = vdwg.mxu0
    %2107 = vmatprep.subr.bf16.mxu0 %v1521
    %2108 = vmatpush1.bf16.msra.mxu0 %v1520
    %2109 = vmatprep.subr.bf16.mxu0 %v1525
    %2110 = vmatpush1.bf16.msra.mxu0 %v1524
    %2111 = vmatprep.subr.bf16.mxu0 %v1529
    %2112 = vmatpush1.bf16.msra.mxu0 %v1528
    %2113 = vmatprep.subr.bf16.mxu0 %v1533
    %2114 = vmatpush1.bf16.msra.mxu0 %v1532
    %2115 = vmatprep.subr.bf16.mxu0 %v1537
    %2116 = vmatpush1.bf16.msra.mxu0 %v1536
    %2117 = vmatprep.subr.bf16.mxu0 %v1541
    %2118 = vmatpush1.bf16.msra.mxu0 %v1540
    %2119 = vmatprep.subr.bf16.mxu0 %v1545
    %2120 = vmatpush1.bf16.msra.mxu0 %v1544
    %2121 = vmatprep.subr.bf16.mxu0 %v1549
    %2122 = vmatpush1.bf16.msra.mxu0 %v1548
    %2123 = vmatprep.subr.bf16.mxu0 %v1553
    %2124 = vmatpush1.bf16.msra.mxu0 %v1552
    %2125 = vmatprep.subr.bf16.mxu0 %v1557
    %2126 = vmatpush1.bf16.msra.mxu0 %v1556
    %2127 = vmatprep.subr.bf16.mxu0 %v1561
    %2128 = vmatpush1.bf16.msra.mxu0 %v1560
    %2129 = vmatprep.subr.bf16.mxu0 %v1565
    %2130 = vmatpush1.bf16.msra.mxu0 %v1564
    %2131 = vmatprep.subr.bf16.mxu0 %v1569
    %2132 = vmatpush1.bf16.msra.mxu0 %v1568
    %2133 = vmatprep.subr.bf16.mxu0 %v1573
    %2134 = vmatpush1.bf16.msra.mxu0 %v1572
    %2135 = vmatprep.subr.bf16.mxu0 %v1577
    %2136 = vmatpush1.bf16.msra.mxu0 %v1576
    %2137 = vmatprep.subr.bf16.mxu0 %v1581
    %2138 = vmatpush1.bf16.msra.mxu0 %v1580
    %2139 = vmatprep.mubr.bf16.mxu0 %v533
    %2140 = vmatmul.mubr.bf16.gmra.mrb[0].mxu0 %v532
    %v2141 = vpop.f32.mrb[0].mxu0
    %v2142 = vadd.f32 %v2101, %v2141
    %v2143 = vpop.f32.mrb[0].mxu0
    %v2144 = vadd.f32 %v2103, %v2143
    %v2145 = vpop.f32.mrb[0].mxu0
    %v2146 = vpop.f32.mrb[0].mxu0
    %2147 = vdwg.mxu0
    %2148 = vmatprep.subr.bf16.mxu0 %v1585
    %2149 = vmatpush1.bf16.msra.mxu0 %v1584
    %2150 = vmatprep.subr.bf16.mxu0 %v1589
    %2151 = vmatpush1.bf16.msra.mxu0 %v1588
    %2152 = vmatprep.subr.bf16.mxu0 %v1593
    %2153 = vmatpush1.bf16.msra.mxu0 %v1592
    %2154 = vmatprep.subr.bf16.mxu0 %v1597
    %2155 = vmatpush1.bf16.msra.mxu0 %v1596
    %2156 = vmatprep.subr.bf16.mxu0 %v1601
    %2157 = vmatpush1.bf16.msra.mxu0 %v1600
    %2158 = vmatprep.subr.bf16.mxu0 %v1605
    %2159 = vmatpush1.bf16.msra.mxu0 %v1604
    %2160 = vmatprep.subr.bf16.mxu0 %v1609
    %2161 = vmatpush1.bf16.msra.mxu0 %v1608
    %2162 = vmatprep.subr.bf16.mxu0 %v1613
    %2163 = vmatpush1.bf16.msra.mxu0 %v1612
    %2164 = vmatprep.subr.bf16.mxu0 %v1617
    %2165 = vmatpush1.bf16.msra.mxu0 %v1616
    %2166 = vmatprep.subr.bf16.mxu0 %v1621
    %2167 = vmatpush1.bf16.msra.mxu0 %v1620
    %2168 = vmatprep.subr.bf16.mxu0 %v1625
    %2169 = vmatpush1.bf16.msra.mxu0 %v1624
    %2170 = vmatprep.subr.bf16.mxu0 %v1629
    %2171 = vmatpush1.bf16.msra.mxu0 %v1628
    %2172 = vmatprep.subr.bf16.mxu0 %v1633
    %2173 = vmatpush1.bf16.msra.mxu0 %v1632
    %2174 = vmatprep.subr.bf16.mxu0 %v1637
    %2175 = vmatpush1.bf16.msra.mxu0 %v1636
    %2176 = vmatprep.subr.bf16.mxu0 %v1641
    %2177 = vmatpush1.bf16.msra.mxu0 %v1640
    %2178 = vmatprep.subr.bf16.mxu0 %v1645
    %2179 = vmatpush1.bf16.msra.mxu0 %v1644
    %2180 = vmatprep.mubr.bf16.mxu0 %v535
    %2181 = vmatmul.mubr.bf16.gmra.mrb[0].mxu0 %v534
    %v2182 = vpop.f32.mrb[0].mxu0
    %v2183 = vadd.f32 %v2142, %v2182
    %v2184 = vpop.f32.mrb[0].mxu0
    %v2185 = vadd.f32 %v2144, %v2184
    %v2186 = vpop.f32.mrb[0].mxu0
    %v2187 = vpop.f32.mrb[0].mxu0
    %2188 = vdwg.mxu0
    %2189 = vmatprep.subr.bf16.mxu0 %v1649
    %2190 = vmatpush1.bf16.msra.mxu0 %v1648
    %2191 = vmatprep.subr.bf16.mxu0 %v1653
    %2192 = vmatpush1.bf16.msra.mxu0 %v1652
    %2193 = vmatprep.subr.bf16.mxu0 %v1657
    %2194 = vmatpush1.bf16.msra.mxu0 %v1656
    %2195 = vmatprep.subr.bf16.mxu0 %v1661
    %2196 = vmatpush1.bf16.msra.mxu0 %v1660
    %2197 = vmatprep.subr.bf16.mxu0 %v1665
    %2198 = vmatpush1.bf16.msra.mxu0 %v1664
    %2199 = vmatprep.subr.bf16.mxu0 %v1669
    %2200 = vmatpush1.bf16.msra.mxu0 %v1668
    %2201 = vmatprep.subr.bf16.mxu0 %v1673
    %2202 = vmatpush1.bf16.msra.mxu0 %v1672
    %2203 = vmatprep.subr.bf16.mxu0 %v1677
    %2204 = vmatpush1.bf16.msra.mxu0 %v1676
    %2205 = vmatprep.subr.bf16.mxu0 0
    %2206 = vmatpush1.bf16.msra.mxu0 0
    %2207 = vmatprep.subr.bf16.mxu0 0
    %2208 = vmatpush1.bf16.msra.mxu0 0
    %2209 = vmatprep.subr.bf16.mxu0 0
    %2210 = vmatpush1.bf16.msra.mxu0 0
    %2211 = vmatprep.subr.bf16.mxu0 0
    %2212 = vmatpush1.bf16.msra.mxu0 0
    %2213 = vmatprep.subr.bf16.mxu0 0
    %2214 = vmatpush1.bf16.msra.mxu0 0
    %2215 = vmatprep.subr.bf16.mxu0 0
    %2216 = vmatpush1.bf16.msra.mxu0 0
    %2217 = vmatprep.subr.bf16.mxu0 0
    %2218 = vmatpush1.bf16.msra.mxu0 0
    %2219 = vmatprep.subr.bf16.mxu0 0
    %2220 = vmatpush1.bf16.msra.mxu0 0
    %2221 = vmatprep.mubr.bf16.mxu0 0
    %2222 = vmatmul.mubr.bf16.gmra.mrb[0].mxu0 %v536
    %v2223 = vpop.f32.mrb[0].mxu0
    %v2224 = vadd.f32 %v2183, %v2223
    %v2225 = vpop.f32.mrb[0].mxu0
    %v2226 = vadd.f32 %v2185, %v2225
    %v2227 = vpop.f32.mrb[0].mxu0
    %v2228 = vpop.f32.mrb[0].mxu0
    %2229 = vdwg.mxu0
    %v2230 = vmul.f32 %v2060, %v2060
    %v2231 = vmul.f32 %v2062, %v2062
    %v2232 = vmul.f32 %v2224, %v2224
    %v2233 = vmul.f32 %v2226, %v2226
    %v2234 = vmul.f32 %v2060, %v2230
    %v2235 = vmul.f32 %v2062, %v2231
    %v2236 = vmul.f32 %v2224, %v2232
    %v2237 = vmul.f32 %v2226, %v2233
    %v2238 = vmul.f32 %v2234, 0.044715
    %v2239 = vmul.f32 %v2235, 0.044715
    %v2240 = vmul.f32 %v2236, 0.044715
    %v2241 = vmul.f32 %v2237, 0.044715
    %v2242 = vadd.f32 %v2060, %v2238
    %v2243 = vadd.f32 %v2062, %v2239
    %v2244 = vadd.f32 %v2224, %v2240
    %v2245 = vadd.f32 %v2226, %v2241
    %v2246 = vmul.f32 %v2242, 0.7978846
    %v2247 = vmul.f32 %v2243, 0.7978846
    %v2248 = vmul.f32 %v2244, 0.7978846
    %v2249 = vmul.f32 %v2245, 0.7978846
    %v2250 = vtanh.pop %v2246
    %v2251 = vtanh.pop %v2247
    %v2252 = vtanh.pop %v2248
    %v2253 = vtanh.pop %v2249
    %v2254 = vadd.f32 %v2250, 1.0
    %v2255 = vadd.f32 %v2251, 1.0
    %v2256 = vadd.f32 %v2252, 1.0
    %v2257 = vadd.f32 %v2253, 1.0
    %v2258 = vmul.f32 %v2254, 0.5
    %v2259 = vmul.f32 %v2255, 0.5
    %v2260 = vmul.f32 %v2256, 0.5
    %v2261 = vmul.f32 %v2257, 0.5
    %v2262 = vmul.f32 %v2060, %v2258
    %v2263 = vmul.f32 %v2062, %v2259
    %v2264 = vmul.f32 %v2224, %v2260
    %v2265 = vmul.f32 %v2226, %v2261
    %v2266 = vpack.c.bf16 %v2262, %v2262
    %v2267 = vpack.c.bf16 %v2263, %v2263
    %v2268 = vpack.c.bf16 %v2264, %v2264
    %v2269 = vpack.c.bf16 %v2265, %v2265
    %v2270 = vld [vmem:[%s3] sm:$0xf]
    %v2271 = vld [vmem:[%s3 + $0x4] sm:$0xf]
    %v2272 = vld [vmem:[%s3 + $0x8] sm:$0xf]
    %v2273 = vld [vmem:[%s3 + $0xc] sm:$0xf]
    %v2274 = vld [vmem:[%s3 + $0x10] sm:$0xf]
    %v2275 = vld [vmem:[%s3 + $0x14] sm:$0xf]
    %v2276 = vld [vmem:[%s3 + $0x18] sm:$0xf]
    %v2277 = vld [vmem:[%s3 + $0x1c] sm:$0xf]
    %v2278 = vld [vmem:[%s3 + $0x20] sm:$0xf]
    %v2279 = vld [vmem:[%s3 + $0x24] sm:$0xf]
    %v2280 = vld [vmem:[%s3 + $0x28] sm:$0xf]
    %v2281 = vld [vmem:[%s3 + $0x2c] sm:$0xf]
    %v2282 = vld [vmem:[%s3 + $0x30] sm:$0xf]
    %v2283 = vld [vmem:[%s3 + $0x34] sm:$0xf]
    %v2284 = vld [vmem:[%s3 + $0x38] sm:$0xf]
    %v2285 = vld [vmem:[%s3 + $0x3c] sm:$0xf]
    %v2286 = vld [vmem:[%s3 + $0x40] sm:$0xf]
    %v2287 = vld [vmem:[%s3 + $0x44] sm:$0xf]
    %v2288 = vld [vmem:[%s3 + $0x48] sm:$0xf]
    %v2289 = vld [vmem:[%s3 + $0x4c] sm:$0xf]
    %v2290 = vld [vmem:[%s3 + $0x50] sm:$0xf]
    %v2291 = vld [vmem:[%s3 + $0x54] sm:$0xf]
    %v2292 = vld [vmem:[%s3 + $0x58] sm:$0xf]
    %v2293 = vld [vmem:[%s3 + $0x5c] sm:$0xf]
    %v2294 = vld [vmem:[%s3 + $0x60] sm:$0xf]
    %v2295 = vld [vmem:[%s3 + $0x64] sm:$0xf]
    %v2296 = vld [vmem:[%s3 + $0x68] sm:$0xf]
    %v2297 = vld [vmem:[%s3 + $0x6c] sm:$0xf]
    %v2298 = vld [vmem:[%s3 + $0x70] sm:$0xf]
    %v2299 = vld [vmem:[%s3 + $0x74] sm:$0xf]
    %v2300 = vld [vmem:[%s3 + $0x78] sm:$0xf]
    %v2301 = vld [vmem:[%s3 + $0x7c] sm:$0xf]
    %v2302 = vld [vmem:[%s3 + $0x80] sm:$0xf]
    %v2303 = vld [vmem:[%s3 + $0x84] sm:$0xf]
    %v2304 = vld [vmem:[%s3 + $0x88] sm:$0xf]
    %v2305 = vld [vmem:[%s3 + $0x8c] sm:$0xf]
    %v2306 = vld [vmem:[%s3 + $0x90] sm:$0xf]
    %v2307 = vld [vmem:[%s3 + $0x94] sm:$0xf]
    %v2308 = vld [vmem:[%s3 + $0x98] sm:$0xf]
    %v2309 = vld [vmem:[%s3 + $0x9c] sm:$0xf]
    %v2310 = vld [vmem:[%s3 + $0xa0] sm:$0xf]
    %v2311 = vld [vmem:[%s3 + $0xa4] sm:$0xf]
    %v2312 = vld [vmem:[%s3 + $0xa8] sm:$0xf]
    %v2313 = vld [vmem:[%s3 + $0xac] sm:$0xf]
    %v2314 = vld [vmem:[%s3 + $0xb0] sm:$0xf]
    %v2315 = vld [vmem:[%s3 + $0xb4] sm:$0xf]
    %v2316 = vld [vmem:[%s3 + $0xb8] sm:$0xf]
    %v2317 = vld [vmem:[%s3 + $0xbc] sm:$0xf]
    %v2318 = vld [vmem:[%s3 + $0xc0] sm:$0xf]
    %v2319 = vld [vmem:[%s3 + $0xc4] sm:$0xf]
    %v2320 = vld [vmem:[%s3 + $0xc8] sm:$0xf]
    %v2321 = vld [vmem:[%s3 + $0xcc] sm:$0xf]
    %v2322 = vld [vmem:[%s3 + $0xd0] sm:$0xf]
    %v2323 = vld [vmem:[%s3 + $0xd4] sm:$0xf]
    %v2324 = vld [vmem:[%s3 + $0xd8] sm:$0xf]
    %v2325 = vld [vmem:[%s3 + $0xdc] sm:$0xf]
    %v2326 = vld [vmem:[%s3 + $0xe0] sm:$0xf]
    %v2327 = vld [vmem:[%s3 + $0xe4] sm:$0xf]
    %v2328 = vld [vmem:[%s3 + $0xe8] sm:$0xf]
    %v2329 = vld [vmem:[%s3 + $0xec] sm:$0xf]
    %v2330 = vld [vmem:[%s3 + $0xf0] sm:$0xf]
    %v2331 = vld [vmem:[%s3 + $0xf4] sm:$0xf]
    %v2332 = vld [vmem:[%s3 + $0xf8] sm:$0xf]
    %v2333 = vld [vmem:[%s3 + $0xfc] sm:$0xf]
    %v2335 = vlaneseq
    %v2336 = vshrl.u32 %v2335, 7
    %v2337 = vsub.s32 0, %v2336
    %v2338 = vrot.slane %v38, %v2337
    %v2404 = vunpack.c.l.b16 %v2270
    %v2405 = vunpack.c.l.b16 %v2271
    %v2406 = vunpack.c.l.b16 %v2272
    %v2407 = vunpack.c.l.b16 %v2273
    %v2408 = vunpack.c.l.b16 %v2274
    %v2409 = vunpack.c.l.b16 %v2275
    %v2410 = vunpack.c.l.b16 %v2276
    %v2411 = vunpack.c.l.b16 %v2277
    %v2412 = vunpack.c.l.b16 %v2278
    %v2413 = vunpack.c.l.b16 %v2279
    %v2414 = vunpack.c.l.b16 %v2280
    %v2415 = vunpack.c.l.b16 %v2281
    %v2416 = vunpack.c.l.b16 %v2282
    %v2417 = vunpack.c.l.b16 %v2283
    %v2418 = vunpack.c.l.b16 %v2284
    %v2419 = vunpack.c.l.b16 %v2285
    %v2420 = vunpack.c.l.b16 %v2286
    %v2421 = vunpack.c.l.b16 %v2287
    %v2422 = vunpack.c.l.b16 %v2288
    %v2423 = vunpack.c.l.b16 %v2289
    %v2424 = vunpack.c.l.b16 %v2290
    %v2425 = vunpack.c.l.b16 %v2291
    %v2426 = vunpack.c.l.b16 %v2292
    %v2427 = vunpack.c.l.b16 %v2293
    %v2428 = vunpack.c.l.b16 %v2294
    %v2429 = vunpack.c.l.b16 %v2295
    %v2430 = vunpack.c.l.b16 %v2296
    %v2431 = vunpack.c.l.b16 %v2297
    %v2432 = vunpack.c.l.b16 %v2298
    %v2433 = vunpack.c.l.b16 %v2299
    %v2434 = vunpack.c.l.b16 %v2300
    %v2435 = vunpack.c.l.b16 %v2301
    %v2436 = vunpack.c.l.b16 %v2302
    %v2437 = vunpack.c.l.b16 %v2303
    %v2438 = vunpack.c.l.b16 %v2304
    %v2439 = vunpack.c.l.b16 %v2305
    %v2440 = vunpack.c.l.b16 %v2306
    %v2441 = vunpack.c.l.b16 %v2307
    %v2442 = vunpack.c.l.b16 %v2308
    %v2443 = vunpack.c.l.b16 %v2309
    %v2444 = vunpack.c.l.b16 %v2310
    %v2445 = vunpack.c.l.b16 %v2311
    %v2446 = vunpack.c.l.b16 %v2312
    %v2447 = vunpack.c.l.b16 %v2313
    %v2448 = vunpack.c.l.b16 %v2314
    %v2449 = vunpack.c.l.b16 %v2315
    %v2450 = vunpack.c.l.b16 %v2316
    %v2451 = vunpack.c.l.b16 %v2317
    %v2452 = vunpack.c.l.b16 %v2318
    %v2453 = vunpack.c.l.b16 %v2319
    %v2454 = vunpack.c.l.b16 %v2320
    %v2455 = vunpack.c.l.b16 %v2321
    %v2456 = vunpack.c.l.b16 %v2322
    %v2457 = vunpack.c.l.b16 %v2323
    %v2458 = vunpack.c.l.b16 %v2324
    %v2459 = vunpack.c.l.b16 %v2325
    %v2460 = vunpack.c.l.b16 %v2326
    %v2461 = vunpack.c.l.b16 %v2327
    %v2462 = vunpack.c.l.b16 %v2328
    %v2463 = vunpack.c.l.b16 %v2329
    %v2464 = vunpack.c.l.b16 %v2330
    %v2465 = vunpack.c.l.b16 %v2331
    %v2466 = vunpack.c.l.b16 %v2332
    %v2467 = vunpack.c.l.b16 %v2333
    %v2468 = vpack.c.b16 %v2405, %v2404
    %v2469 = vpack.c.b16 %v2407, %v2406
    %v2470 = vpack.c.b16 %v2409, %v2408
    %v2471 = vpack.c.b16 %v2411, %v2410
    %v2472 = vpack.c.b16 %v2413, %v2412
    %v2473 = vpack.c.b16 %v2415, %v2414
    %v2474 = vpack.c.b16 %v2417, %v2416
    %v2475 = vpack.c.b16 %v2419, %v2418
    %v2476 = vpack.c.b16 %v2421, %v2420
    %v2477 = vpack.c.b16 %v2423, %v2422
    %v2478 = vpack.c.b16 %v2425, %v2424
    %v2479 = vpack.c.b16 %v2427, %v2426
    %v2480 = vpack.c.b16 %v2429, %v2428
    %v2481 = vpack.c.b16 %v2431, %v2430
    %v2482 = vpack.c.b16 %v2433, %v2432
    %v2483 = vpack.c.b16 %v2435, %v2434
    %v2484 = vpack.c.b16 %v2437, %v2436
    %v2485 = vpack.c.b16 %v2439, %v2438
    %v2486 = vpack.c.b16 %v2441, %v2440
    %v2487 = vpack.c.b16 %v2443, %v2442
    %v2488 = vpack.c.b16 %v2445, %v2444
    %v2489 = vpack.c.b16 %v2447, %v2446
    %v2490 = vpack.c.b16 %v2449, %v2448
    %v2491 = vpack.c.b16 %v2451, %v2450
    %v2492 = vpack.c.b16 %v2453, %v2452
    %v2493 = vpack.c.b16 %v2455, %v2454
    %v2494 = vpack.c.b16 %v2457, %v2456
    %v2495 = vpack.c.b16 %v2459, %v2458
    %v2496 = vpack.c.b16 %v2461, %v2460
    %v2497 = vpack.c.b16 %v2463, %v2462
    %v2498 = vpack.c.b16 %v2465, %v2464
    %v2499 = vpack.c.b16 %v2467, %v2466
    %2532 = vmatprep.subr.bf16.mxu0 0
    %2533 = vmatpush1.bf16.msra.mxu0 %v2468
    %2534 = vmatprep.subr.bf16.mxu0 0
    %2535 = vmatpush1.bf16.msra.mxu0 %v2469
    %2536 = vmatprep.subr.bf16.mxu0 0
    %2537 = vmatpush1.bf16.msra.mxu0 %v2470
    %2538 = vmatprep.subr.bf16.mxu0 0
    %2539 = vmatpush1.bf16.msra.mxu0 %v2471
    %2540 = vmatprep.subr.bf16.mxu0 0
    %2541 = vmatpush1.bf16.msra.mxu0 %v2472
    %2542 = vmatprep.subr.bf16.mxu0 0
    %2543 = vmatpush1.bf16.msra.mxu0 %v2473
    %2544 = vmatprep.subr.bf16.mxu0 0
    %2545 = vmatpush1.bf16.msra.mxu0 %v2474
    %2546 = vmatprep.subr.bf16.mxu0 0
    %2547 = vmatpush1.bf16.msra.mxu0 %v2475
    %2548 = vmatprep.subr.bf16.mxu0 0
    %2549 = vmatpush1.bf16.msra.mxu0 %v2476
    %2550 = vmatprep.subr.bf16.mxu0 0
    %2551 = vmatpush1.bf16.msra.mxu0 %v2477
    %2552 = vmatprep.subr.bf16.mxu0 0
    %2553 = vmatpush1.bf16.msra.mxu0 %v2478
    %2554 = vmatprep.subr.bf16.mxu0 0
    %2555 = vmatpush1.bf16.msra.mxu0 %v2479
    %2556 = vmatprep.subr.bf16.mxu0 0
    %2557 = vmatpush1.bf16.msra.mxu0 %v2480
    %2558 = vmatprep.subr.bf16.mxu0 0
    %2559 = vmatpush1.bf16.msra.mxu0 %v2481
    %2560 = vmatprep.subr.bf16.mxu0 0
    %2561 = vmatpush1.bf16.msra.mxu0 %v2482
    %2562 = vmatprep.subr.bf16.mxu0 0
    %2563 = vmatpush1.bf16.msra.mxu0 %v2483
    %2564 = vmatprep.mubr.bf16.mxu0 %v2267
    %2565 = vmatmul.mubr.bf16.gmra.mrb[0].mxu0 %v2266
    %v2566 = vpop.f32.mrb[0].mxu0
    %v2567 = vadd.f32 %v2338, %v2566
    %v2568 = vpop.f32.mrb[0].mxu0
    %v2569 = vpop.f32.mrb[0].mxu0
    %v2570 = vpop.f32.mrb[0].mxu0
    %2571 = vdwg.mxu0
    %2572 = vmatprep.subr.bf16.mxu0 0
    %2573 = vmatpush1.bf16.msra.mxu0 %v2484
    %2574 = vmatprep.subr.bf16.mxu0 0
    %2575 = vmatpush1.bf16.msra.mxu0 %v2485
    %2576 = vmatprep.subr.bf16.mxu0 0
    %2577 = vmatpush1.bf16.msra.mxu0 %v2486
    %2578 = vmatprep.subr.bf16.mxu0 0
    %2579 = vmatpush1.bf16.msra.mxu0 %v2487
    %2580 = vmatprep.subr.bf16.mxu0 0
    %2581 = vmatpush1.bf16.msra.mxu0 %v2488
    %2582 = vmatprep.subr.bf16.mxu0 0
    %2583 = vmatpush1.bf16.msra.mxu0 %v2489
    %2584 = vmatprep.subr.bf16.mxu0 0
    %2585 = vmatpush1.bf16.msra.mxu0 %v2490
    %2586 = vmatprep.subr.bf16.mxu0 0
    %2587 = vmatpush1.bf16.msra.mxu0 %v2491
    %2588 = vmatprep.subr.bf16.mxu0 0
    %2589 = vmatpush1.bf16.msra.mxu0 %v2492
    %2590 = vmatprep.subr.bf16.mxu0 0
    %2591 = vmatpush1.bf16.msra.mxu0 %v2493
    %2592 = vmatprep.subr.bf16.mxu0 0
    %2593 = vmatpush1.bf16.msra.mxu0 %v2494
    %2594 = vmatprep.subr.bf16.mxu0 0
    %2595 = vmatpush1.bf16.msra.mxu0 %v2495
    %2596 = vmatprep.subr.bf16.mxu0 0
    %2597 = vmatpush1.bf16.msra.mxu0 %v2496
    %2598 = vmatprep.subr.bf16.mxu0 0
    %2599 = vmatpush1.bf16.msra.mxu0 %v2497
    %2600 = vmatprep.subr.bf16.mxu0 0
    %2601 = vmatpush1.bf16.msra.mxu0 %v2498
    %2602 = vmatprep.subr.bf16.mxu0 0
    %2603 = vmatpush1.bf16.msra.mxu0 %v2499
    %2604 = vmatprep.mubr.bf16.mxu0 %v2269
    %2605 = vmatmul.mubr.bf16.gmra.mrb[0].mxu0 %v2268
    %v2606 = vpop.f32.mrb[0].mxu0
    %v2607 = vadd.f32 %v2567, %v2606
    %v2608 = vpop.f32.mrb[0].mxu0
    %v2609 = vpop.f32.mrb[0].mxu0
    %v2610 = vpop.f32.mrb[0].mxu0
    %2611 = vdwg.mxu0
    %vm2612 = vcmask 654336
    %2613 = vst.msk [vmem:[#allocation5] sm:$0xff] %vm2612, %v2607
    // Predicated region
    $region26: #{tpu_custom_call.1} parent=1 // pred_check
      _
    $region27: #{tpu_custom_call.1} parent=1 // pred_check_branch
      %2615 = sbr.rel (0) target = $region29
    $region28: #{tpu_custom_call.1} parent=1 // pred_region
      %s2617 = ssub.s32 128, 128
      %2618 = vsyncadd [#allocation4], %s2617
      %s2620 = sshll.u32 [#allocation5], 4
      %s2621 = int_to_ptr.vmem [resolvable:$true] %s2620
      %2623 = dma.vmem_to_hbm [thread:$0]  %s2621, 128, %s5, [#allocation4]
    $region29: #{tpu_custom_call.1} parent=1 // pred_fallthru
      _
    // Predicated region
    $region30: #{tpu_custom_call.1} parent=1 // pred_check
      _
    $region31: #{tpu_custom_call.1} parent=1 // pred_check_branch
      %2625 = sbr.rel (0) target = $region33
    $region32: #{tpu_custom_call.1} parent=1 // pred_region
      %2626 = dma.done [#allocation4], 128
    $region33: #{tpu_custom_call.1} parent=1 // pred_fallthru
      _
    %2627 = vsyncpa [#allocation3], 1
    %2628 = vsyncpa [#allocation4], 1

</llo_original>
